<compile_context>
chip_gen: v5e
topology: v5e:2x2
jax: 0.10.0
libtpu: 0.0.40
codegen_flags: <defaults>
</compile_context>

<pallas_src>
import functools

import jax
import jax.numpy as jnp
from jax.experimental import pallas as pl
from jax.experimental.pallas import tpu as pltpu

EPS = 1e-5


# --------------------------------------------------------------------------- #
# Strided conv kernel: one im2col matmul per batch element.
#
# The input arrives space-to-depth'ed:  xs[n, (ph*s+pw)*Hc + i, j, c]
#   == padded_x[n, s*i + ph, s*j + pw, c]
# so tap (kh, kw) of the *strided* conv is a contiguous static slice
# (no strided loads, no dense-then-subsample waste).
# --------------------------------------------------------------------------- #
def _make_conv_kernel(KH, KW, stride, Hc, Ho, Wo, Cin):
    s = stride

    def kernel(x_ref, w_ref, o_ref):
        xb = x_ref[0]                                        # (s*s*Hc, Wc, Cin)
        cols = []
        for kh in range(KH):
            qh, ph = kh // s, kh % s
            for kw in range(KW):
                qw, pw = kw // s, kw % s
                base = (ph * s + pw) * Hc + qh
                patch = xb[base:base + Ho, qw:qw + Wo, :]    # (Ho, Wo, Cin)
                cols.append(patch.reshape(Ho * Wo, Cin))
        # im2col-in-VMEM: single (Ho*Wo, KH*KW*Cin) x (KH*KW*Cin, Cout_tot) matmul.
        pmat = jnp.concatenate(cols, axis=-1).astype(jnp.float32)
        o_ref[0] = jnp.dot(
            pmat, w_ref[...].astype(jnp.float32),
            preferred_element_type=jnp.float32).astype(o_ref.dtype)

    return kernel


def _space_to_depth_pad(x_nchw, k, stride):
    """NCHW -> padded, space-to-depth'ed layout (N, s*s*Hc, Wc, C).

    This single XLA shuffle replaces the previous wrapper-side jnp.pad AND the
    NCHW->NHWC transpose, and is what lets the kernel fold the stride."""
    N, C, H, W = x_nchw.shape
    s, pad = stride, k // 2
    Hc = -(-(H + 2 * pad) // s)
    Wc = -(-(W + 2 * pad) // s)
    xp = jnp.pad(x_nchw, ((0, 0), (0, 0),
                          (pad, Hc * s - H - pad),
                          (pad, Wc * s - W - pad)))
    xs = xp.reshape(N, C, Hc, s, Wc, s).transpose(0, 3, 5, 2, 4, 1)
    return xs.reshape(N, s * s * Hc, Wc, C), Hc, Wc


def conv2d_strided(x_nchw, w_flat, k, stride):
    """Strided "same" conv.  w_flat: (k*k*Cin, Cout_tot).  Returns (N, Ho*Wo, Cout_tot)."""
    N, C, H, W = x_nchw.shape
    pad = k // 2
    Ho = (H + 2 * pad - k) // stride + 1
    Wo = (W + 2 * pad - k) // stride + 1
    Cout_tot = w_flat.shape[1]
    xs, Hc, Wc = _space_to_depth_pad(x_nchw, k, stride)

    out = pl.pallas_call(
        _make_conv_kernel(k, k, stride, Hc, Ho, Wo, C),
        out_shape=jax.ShapeDtypeStruct((N, Ho * Wo, Cout_tot), x_nchw.dtype),
        grid=(N,),
        in_specs=[
            pl.BlockSpec((1, stride * stride * Hc, Wc, C), lambda n: (n, 0, 0, 0)),
            pl.BlockSpec((k * k * C, Cout_tot), lambda n: (0, 0)),
        ],
        out_specs=pl.BlockSpec((1, Ho * Wo, Cout_tot), lambda n: (n, 0, 0)),
        compiler_params=pltpu.CompilerParams(dimension_semantics=("parallel",)),
    )(xs, w_flat)
    # TODO(synk): at ResNet-scale activations add a second, spatial "parallel"
    # grid axis (output-row tiles) so v7x's two TensorCores both stay busy and
    # the per-core VMEM block stays under its 64 MiB limit.
    return out, Ho, Wo


# --------------------------------------------------------------------------- #
# Fused tail: BN1 + ReLU -> conv2 (3x3, stride 1, im2col matmul) -> BN2,
# shortcut BN (projection) or identity, residual add, final ReLU — one kernel.
# --------------------------------------------------------------------------- #
def _bn(x, gamma, beta):
    mean = jnp.mean(x, axis=0, keepdims=True)
    var = jnp.mean((x - mean) ** 2, axis=0, keepdims=True)       # biased variance
    return (x - mean) * jax.lax.rsqrt(var + EPS) * gamma + beta  # rsqrt -> EUP


def _make_tail_kernel(N, Ho, Wo, Cout, KH, KW, with_proj):
    M = N * Ho * Wo
    pad_h, pad_w = KH // 2, KW // 2

    def kernel(*refs):
        if with_proj:
            (y1c_ref, w2_ref, g1_ref, b1_ref, g2_ref, b2_ref,
             gs_ref, bs_ref, o_ref, pad_ref) = refs
        else:
            (y1c_ref, sc_ref, w2_ref, g1_ref, b1_ref, g2_ref, b2_ref,
             o_ref, pad_ref) = refs

        y1c = y1c_ref[...].astype(jnp.float32)           # (N, Ho*Wo, Cout_tot)

        # BN1 + ReLU on the conv1 channels.
        a1 = _bn(y1c[:, :, :Cout].reshape(M, Cout), g1_ref[...], b1_ref[...])
        a1 = jnp.maximum(a1, 0.0)

        # conv2: zero-pad in VMEM scratch, im2col, one MXU matmul.
        pad_ref[...] = jnp.zeros_like(pad_ref)
        pad_ref[:, pad_h:pad_h + Ho, pad_w:pad_w + Wo, :] = a1.reshape(N, Ho, Wo, Cout)
        cols = [pad_ref[:, kh:kh + Ho, kw:kw + Wo, :].reshape(M, Cout)
                for kh in range(KH) for kw in range(KW)]
        p2 = jnp.concatenate(cols, axis=-1)              # (M, KH*KW*Cout)
        y2 = jnp.dot(p2, w2_ref[...].astype(jnp.float32),
                     preferred_element_type=jnp.float32)

        # BN2 + shortcut branch + residual add + final ReLU.
        y2 = _bn(y2, g2_ref[...], b2_ref[...])
        if with_proj:
            sc = _bn(y1c[:, :, Cout:].reshape(M, Cout), gs_ref[...], bs_ref[...])
        else:
            sc = sc_ref[...].astype(jnp.float32).reshape(M, Cout)

        out = jnp.maximum(y2 + sc, 0.0)
        o_ref[...] = out.reshape(N, Ho, Wo, Cout).astype(o_ref.dtype)

    return kernel


# --------------------------------------------------------------------------- #
# ResBlock forward
# --------------------------------------------------------------------------- #
@functools.partial(jax.jit, static_argnames=("stride",))
def res_block_forward(x_nchw, params, stride):
    N, Cin, H, W = x_nchw.shape
    w1 = params["w1"]                                    # (KH, KW, Cin, Cout)  HWIO
    KH, KW, _, Cout = w1.shape
    w1f = w1.reshape(KH * KW * Cin, Cout)

    with_proj = "ws" in params
    if with_proj:
        # Embed the 1x1 projection weight at the centre tap so the shortcut conv
        # is produced by the *same* matmul as conv1 (extra output columns).
        base = ((KH // 2) * KW + (KW // 2)) * Cin
        ws_emb = jnp.zeros((KH * KW * Cin, Cout), w1.dtype)
        ws_emb = ws_emb.at[base:base + Cin, :].set(params["ws"].reshape(Cin, Cout))
        w_comb = jnp.concatenate([w1f, ws_emb], axis=1)  # (KH*KW*Cin, 2*Cout)
    else:
        w_comb = w1f

    # conv1 (+ fused projection shortcut), stride folded into the kernel.
    y1c, Ho, Wo = conv2d_strided(x_nchw, w_comb, KH, stride)

    w2f = params["w2"].reshape(KH * KW * Cout, Cout)
    g1 = params["g1"].reshape(1, Cout).astype(jnp.float32)
    b1 = params["b1"].reshape(1, Cout).astype(jnp.float32)
    g2 = params["g2"].reshape(1, Cout).astype(jnp.float32)
    b2 = params["b2"].reshape(1, Cout).astype(jnp.float32)

    if with_proj:
        gs = params["gs"].reshape(1, Cout).astype(jnp.float32)
        bs = params["bs"].reshape(1, Cout).astype(jnp.float32)
        args = (y1c, w2f, g1, b1, g2, b2, gs, bs)
    else:
        sc = jnp.transpose(x_nchw, (0, 2, 3, 1)).reshape(N, H * W, Cin)
        args = (y1c, sc, w2f, g1, b1, g2, b2)

    out_nhwc = pl.pallas_call(
        _make_tail_kernel(N, Ho, Wo, Cout, KH, KW, with_proj),
        out_shape=jax.ShapeDtypeStruct((N, Ho, Wo, Cout), x_nchw.dtype),
        scratch_shapes=[pltpu.VMEM((N, Ho + 2 * (KH // 2), Wo + 2 * (KW // 2), Cout),
                                   jnp.float32)],
    )(*args)
    # TODO(synk): at ResNet-scale activations this fused tail must be gridded
    # (two-pass BN: per-tile sum/sumsq accumulation with pl.when init/finalize)
    # to respect v7x's 64 MiB VMEM; at these toy sizes one VMEM block suffices.
    # TODO(synk): BatchNorm running_mean/running_var updates (training-mode side
    # effect) are not modeled; they do not affect the forward output.

    return jnp.transpose(out_nhwc, (0, 3, 1, 2))         # NHWC -> NCHW


# --------------------------------------------------------------------------- #
# Pure-JAX reference (for correctness check)
# --------------------------------------------------------------------------- #
def _ref_conv(x, w, stride):
    pad = w.shape[0] // 2
    return jax.lax.conv_general_dilated(
        x, w, (stride, stride), [(pad, pad), (pad, pad)],
        dimension_numbers=("NHWC", "HWIO", "NHWC"))


def _ref_bn(x, g, b):
    mean = jnp.mean(x, axis=(0, 1, 2), keepdims=True)
    var = jnp.mean((x - mean) ** 2, axis=(0, 1, 2), keepdims=True)
    return (x - mean) * jax.lax.rsqrt(var + EPS) * g.reshape(1, 1, 1, -1) \
        + b.reshape(1, 1, 1, -1)


def ref_res_block(x_nchw, params, stride):
    x = jnp.transpose(x_nchw, (0, 2, 3, 1))
    out = jnp.maximum(_ref_bn(_ref_conv(x, params["w1"], stride),
                              params["g1"], params["b1"]), 0.0)
    out = _ref_bn(_ref_conv(out, params["w2"], 1), params["g2"], params["b2"])
    if "ws" in params:
        sc = _ref_bn(_ref_conv(x, params["ws"], stride),
                     params["gs"], params["bs"])
    else:
        sc = x
    out = jnp.maximum(out + sc, 0.0)
    return jnp.transpose(out, (0, 3, 1, 2))


# --------------------------------------------------------------------------- #
if __name__ == "__main__":
    ks = jax.random.split(jax.random.PRNGKey(0), 18)

    # ---- projection-shortcut case: stride 2, Cin != Cout -------------------- #
    N, C_IN, C_OUT, H, W, STRIDE = 2, 4, 8, 16, 16, 2
    params = {
        "w1": 0.1 * jax.random.normal(ks[0], (3, 3, C_IN, C_OUT), jnp.float32),
        "g1": 1.0 + 0.1 * jax.random.normal(ks[1], (C_OUT,), jnp.float32),
        "b1": 0.1 * jax.random.normal(ks[2], (C_OUT,), jnp.float32),
        "w2": 0.1 * jax.random.normal(ks[3], (3, 3, C_OUT, C_OUT), jnp.float32),
        "g2": 1.0 + 0.1 * jax.random.normal(ks[4], (C_OUT,), jnp.float32),
        "b2": 0.1 * jax.random.normal(ks[5], (C_OUT,), jnp.float32),
        "ws": 0.1 * jax.random.normal(ks[6], (1, 1, C_IN, C_OUT), jnp.float32),
        "gs": 1.0 + 0.1 * jax.random.normal(ks[7], (C_OUT,), jnp.float32),
        "bs": 0.1 * jax.random.normal(ks[8], (C_OUT,), jnp.float32),
    }
    x = jax.random.normal(ks[9], (N, C_IN, H, W), jnp.float32)   # NCHW input

    out = jax.block_until_ready(res_block_forward(x, params, STRIDE))
    expected_shape = (N, C_OUT, H // STRIDE, W // STRIDE)
    assert out.shape == expected_shape, (out.shape, expected_shape)
    ref = ref_res_block(x, params, STRIDE)
    assert jnp.allclose(out, ref, atol=1e-4, rtol=1e-4), \
        float(jnp.max(jnp.abs(out - ref)))

    # ---- identity-shortcut case: stride 1, Cin == Cout ---------------------- #
    C = 8
    params_id = {
        "w1": 0.1 * jax.random.normal(ks[10], (3, 3, C, C), jnp.float32),
        "g1": 1.0 + 0.1 * jax.random.normal(ks[11], (C,), jnp.float32),
        "b1": 0.1 * jax.random.normal(ks[12], (C,), jnp.float32),
        "w2": 0.1 * jax.random.normal(ks[13], (3, 3, C, C), jnp.float32),
        "g2": 1.0 + 0.1 * jax.random.normal(ks[14], (C,), jnp.float32),
        "b2": 0.1 * jax.random.normal(ks[15], (C,), jnp.float32),
    }
    x_id = jax.random.normal(ks[16], (N, C, H, W), jnp.float32)

    out_id = jax.block_until_ready(res_block_forward(x_id, params_id, 1))
    assert out_id.shape == (N, C, H, W), out_id.shape
    ref_id = ref_res_block(x_id, params_id, 1)
    assert jnp.allclose(out_id, ref_id, atol=1e-4, rtol=1e-4), \
        float(jnp.max(jnp.abs(out_id - ref_id)))

    print("KERNEL_OK")
</pallas_src>

<mosaic_0001>
module attributes {stable_mosaic.version = 11 : i64} {
  func.func @kernel(%arg0: memref<2x64x16xf32, #tpu.memory_space<vmem>>, %arg1: memref<72x8xf32, #tpu.memory_space<vmem>>, %arg2: memref<1x8xf32, #tpu.memory_space<vmem>>, %arg3: memref<1x8xf32, #tpu.memory_space<vmem>>, %arg4: memref<1x8xf32, #tpu.memory_space<vmem>>, %arg5: memref<1x8xf32, #tpu.memory_space<vmem>>, %arg6: memref<1x8xf32, #tpu.memory_space<vmem>>, %arg7: memref<1x8xf32, #tpu.memory_space<vmem>>, %arg8: memref<2x8x8x8xf32, #tpu.memory_space<vmem>>, %arg9: memref<2x10x10x8xf32, #tpu.memory_space<vmem>>) attributes {dimension_semantics = [], scalar_prefetch = 0 : i64, scratch_operands = 1 : i64, tpu.core_type = #tpu.core_type<tc>} {
    %c0 = arith.constant 0 : index
    %c0_0 = arith.constant 0 : index
    %c0_1 = arith.constant 0 : index
    %0 = vector.load %arg0[%c0, %c0_0, %c0_1] : memref<2x64x16xf32, #tpu.memory_space<vmem>>, vector<2x64x16xf32>
    %1 = vector.extract_strided_slice %0 {offsets = [0, 0, 0], sizes = [2, 64, 8], strides = [1, 1, 1]} : vector<2x64x16xf32> to vector<2x64x8xf32>
    %2 = vector.shape_cast %1 : vector<2x64x8xf32> to vector<128x8xf32>
    %c0_2 = arith.constant 0 : index
    %c0_3 = arith.constant 0 : index
    %3 = vector.load %arg2[%c0_2, %c0_3] : memref<1x8xf32, #tpu.memory_space<vmem>>, vector<1x8xf32>
    %c0_4 = arith.constant 0 : index
    %c0_5 = arith.constant 0 : index
    %4 = vector.load %arg3[%c0_4, %c0_5] : memref<1x8xf32, #tpu.memory_space<vmem>>, vector<1x8xf32>
    %cst = arith.constant dense<0.000000e+00> : vector<8xf32>
    %5 = vector.multi_reduction <add>, %2, %cst [0] : vector<128x8xf32> to vector<8xf32>
    %6 = vector.shape_cast %5 : vector<8xf32> to vector<1x8xf32>
    %cst_6 = arith.constant 1.280000e+02 : f32
    %7 = vector.broadcast %cst_6 : f32 to vector<1x8xf32>
    %8 = arith.divf %6, %7 : vector<1x8xf32>
    %9 = vector.broadcast %8 : vector<1x8xf32> to vector<128x8xf32>
    %10 = arith.subf %2, %9 : vector<128x8xf32>
    %11 = arith.mulf %10, %10 : vector<128x8xf32>
    %cst_7 = arith.constant dense<0.000000e+00> : vector<8xf32>
    %12 = vector.multi_reduction <add>, %11, %cst_7 [0] : vector<128x8xf32> to vector<8xf32>
    %13 = vector.shape_cast %12 : vector<8xf32> to vector<1x8xf32>
    %cst_8 = arith.constant 1.280000e+02 : f32
    %14 = vector.broadcast %cst_8 : f32 to vector<1x8xf32>
    %15 = arith.divf %13, %14 : vector<1x8xf32>
    %16 = vector.broadcast %8 : vector<1x8xf32> to vector<128x8xf32>
    %17 = arith.subf %2, %16 : vector<128x8xf32>
    %cst_9 = arith.constant 9.99999974E-6 : f32
    %18 = vector.broadcast %cst_9 : f32 to vector<1x8xf32>
    %19 = arith.addf %15, %18 : vector<1x8xf32>
    %20 = math.rsqrt %19 : vector<1x8xf32>
    %21 = vector.broadcast %20 : vector<1x8xf32> to vector<128x8xf32>
    %22 = arith.mulf %17, %21 : vector<128x8xf32>
    %23 = vector.broadcast %3 : vector<1x8xf32> to vector<128x8xf32>
    %24 = arith.mulf %22, %23 : vector<128x8xf32>
    %25 = vector.broadcast %4 : vector<1x8xf32> to vector<128x8xf32>
    %26 = arith.addf %24, %25 : vector<128x8xf32>
    %cst_10 = arith.constant 0.000000e+00 : f32
    %27 = vector.broadcast %cst_10 : f32 to vector<128x8xf32>
    %28 = arith.maximumf %26, %27 : vector<128x8xf32>
    %cst_11 = arith.constant 0.000000e+00 : f32
    %29 = vector.broadcast %cst_11 : f32 to vector<2x10x10x8xf32>
    %c0_12 = arith.constant 0 : index
    %c0_13 = arith.constant 0 : index
    %c0_14 = arith.constant 0 : index
    %c0_15 = arith.constant 0 : index
    %30 = vector.load %arg9[%c0_12, %c0_13, %c0_14, %c0_15] : memref<2x10x10x8xf32, #tpu.memory_space<vmem>>, vector<2x10x10x8xf32>
    tpu.vector_store %arg9[%c0_12, %c0_13, %c0_14, %c0_15], %29 {strides = array<i32>} : memref<2x10x10x8xf32, #tpu.memory_space<vmem>>, vector<2x10x10x8xf32>,
    %31 = vector.shape_cast %28 : vector<128x8xf32> to vector<2x8x8x8xf32>
    %c0_16 = arith.constant 0 : index
    %c1 = arith.constant 1 : index
    %c1_17 = arith.constant 1 : index
    %c0_18 = arith.constant 0 : index
    %32 = vector.load %arg9[%c0_16, %c1, %c1_17, %c0_18] : memref<2x10x10x8xf32, #tpu.memory_space<vmem>>, vector<2x8x8x8xf32>
    tpu.vector_store %arg9[%c0_16, %c1, %c1_17, %c0_18], %31 {strides = array<i32>} : memref<2x10x10x8xf32, #tpu.memory_space<vmem>>, vector<2x8x8x8xf32>,
    %c0_19 = arith.constant 0 : index
    %c0_20 = arith.constant 0 : index
    %c0_21 = arith.constant 0 : index
    %c0_22 = arith.constant 0 : index
    %33 = vector.load %arg9[%c0_19, %c0_20, %c0_21, %c0_22] : memref<2x10x10x8xf32, #tpu.memory_space<vmem>>, vector<2x8x8x8xf32>
    %34 = vector.shape_cast %33 : vector<2x8x8x8xf32> to vector<128x8xf32>
    %c0_23 = arith.constant 0 : index
    %c0_24 = arith.constant 0 : index
    %c1_25 = arith.constant 1 : index
    %c0_26 = arith.constant 0 : index
    %35 = vector.load %arg9[%c0_23, %c0_24, %c1_25, %c0_26] : memref<2x10x10x8xf32, #tpu.memory_space<vmem>>, vector<2x8x8x8xf32>
    %36 = vector.shape_cast %35 : vector<2x8x8x8xf32> to vector<128x8xf32>
    %c0_27 = arith.constant 0 : index
    %c0_28 = arith.constant 0 : index
    %c2 = arith.constant 2 : index
    %c0_29 = arith.constant 0 : index
    %37 = vector.load %arg9[%c0_27, %c0_28, %c2, %c0_29] : memref<2x10x10x8xf32, #tpu.memory_space<vmem>>, vector<2x8x8x8xf32>
    %38 = vector.shape_cast %37 : vector<2x8x8x8xf32> to vector<128x8xf32>
    %c0_30 = arith.constant 0 : index
    %c1_31 = arith.constant 1 : index
    %c0_32 = arith.constant 0 : index
    %c0_33 = arith.constant 0 : index
    %39 = vector.load %arg9[%c0_30, %c1_31, %c0_32, %c0_33] : memref<2x10x10x8xf32, #tpu.memory_space<vmem>>, vector<2x8x8x8xf32>
    %40 = vector.shape_cast %39 : vector<2x8x8x8xf32> to vector<128x8xf32>
    %c0_34 = arith.constant 0 : index
    %c1_35 = arith.constant 1 : index
    %c1_36 = arith.constant 1 : index
    %c0_37 = arith.constant 0 : index
    %41 = vector.load %arg9[%c0_34, %c1_35, %c1_36, %c0_37] : memref<2x10x10x8xf32, #tpu.memory_space<vmem>>, vector<2x8x8x8xf32>
    %42 = vector.shape_cast %41 : vector<2x8x8x8xf32> to vector<128x8xf32>
    %c0_38 = arith.constant 0 : index
    %c1_39 = arith.constant 1 : index
    %c2_40 = arith.constant 2 : index
    %c0_41 = arith.constant 0 : index
    %43 = vector.load %arg9[%c0_38, %c1_39, %c2_40, %c0_41] : memref<2x10x10x8xf32, #tpu.memory_space<vmem>>, vector<2x8x8x8xf32>
    %44 = vector.shape_cast %43 : vector<2x8x8x8xf32> to vector<128x8xf32>
    %c0_42 = arith.constant 0 : index
    %c2_43 = arith.constant 2 : index
    %c0_44 = arith.constant 0 : index
    %c0_45 = arith.constant 0 : index
    %45 = vector.load %arg9[%c0_42, %c2_43, %c0_44, %c0_45] : memref<2x10x10x8xf32, #tpu.memory_space<vmem>>, vector<2x8x8x8xf32>
    %46 = vector.shape_cast %45 : vector<2x8x8x8xf32> to vector<128x8xf32>
    %c0_46 = arith.constant 0 : index
    %c2_47 = arith.constant 2 : index
    %c1_48 = arith.constant 1 : index
    %c0_49 = arith.constant 0 : index
    %47 = vector.load %arg9[%c0_46, %c2_47, %c1_48, %c0_49] : memref<2x10x10x8xf32, #tpu.memory_space<vmem>>, vector<2x8x8x8xf32>
    %48 = vector.shape_cast %47 : vector<2x8x8x8xf32> to vector<128x8xf32>
    %c0_50 = arith.constant 0 : index
    %c2_51 = arith.constant 2 : index
    %c2_52 = arith.constant 2 : index
    %c0_53 = arith.constant 0 : index
    %49 = vector.load %arg9[%c0_50, %c2_51, %c2_52, %c0_53] : memref<2x10x10x8xf32, #tpu.memory_space<vmem>>, vector<2x8x8x8xf32>
    %50 = vector.shape_cast %49 : vector<2x8x8x8xf32> to vector<128x8xf32>
    %51 = tpu.concatenate %34, %36, %38, %40, %42, %44, %46, %48, %50 in 1 : vector<128x8xf32>, vector<128x8xf32>, vector<128x8xf32>, vector<128x8xf32>, vector<128x8xf32>, vector<128x8xf32>, vector<128x8xf32>, vector<128x8xf32>, vector<128x8xf32> -> vector<128x72xf32>
    %c0_54 = arith.constant 0 : index
    %c0_55 = arith.constant 0 : index
    %52 = vector.load %arg1[%c0_54, %c0_55] : memref<72x8xf32, #tpu.memory_space<vmem>>, vector<72x8xf32>
    %cst_56 = arith.constant dense<0.000000e+00> : vector<128x8xf32>
    %53 = tpu.matmul %51, %52, %cst_56 {dimension_numbers = #tpu.dot_dimension_numbers<[1], [0], [0], [1], [0, 0, 1, 1], [], []>} : vector<128x72xf32>, vector<72x8xf32>, vector<128x8xf32> -> vector<128x8xf32>
    %c0_57 = arith.constant 0 : index
    %c0_58 = arith.constant 0 : index
    %54 = vector.load %arg4[%c0_57, %c0_58] : memref<1x8xf32, #tpu.memory_space<vmem>>, vector<1x8xf32>
    %c0_59 = arith.constant 0 : index
    %c0_60 = arith.constant 0 : index
    %55 = vector.load %arg5[%c0_59, %c0_60] : memref<1x8xf32, #tpu.memory_space<vmem>>, vector<1x8xf32>
    %cst_61 = arith.constant dense<0.000000e+00> : vector<8xf32>
    %56 = vector.multi_reduction <add>, %53, %cst_61 [0] : vector<128x8xf32> to vector<8xf32>
    %57 = vector.shape_cast %56 : vector<8xf32> to vector<1x8xf32>
    %cst_62 = arith.constant 1.280000e+02 : f32
    %58 = vector.broadcast %cst_62 : f32 to vector<1x8xf32>
    %59 = arith.divf %57, %58 : vector<1x8xf32>
    %60 = vector.broadcast %59 : vector<1x8xf32> to vector<128x8xf32>
    %61 = arith.subf %53, %60 : vector<128x8xf32>
    %62 = arith.mulf %61, %61 : vector<128x8xf32>
    %cst_63 = arith.constant dense<0.000000e+00> : vector<8xf32>
    %63 = vector.multi_reduction <add>, %62, %cst_63 [0] : vector<128x8xf32> to vector<8xf32>
    %64 = vector.shape_cast %63 : vector<8xf32> to vector<1x8xf32>
    %cst_64 = arith.constant 1.280000e+02 : f32
    %65 = vector.broadcast %cst_64 : f32 to vector<1x8xf32>
    %66 = arith.divf %64, %65 : vector<1x8xf32>
    %67 = vector.broadcast %59 : vector<1x8xf32> to vector<128x8xf32>
    %68 = arith.subf %53, %67 : vector<128x8xf32>
    %cst_65 = arith.constant 9.99999974E-6 : f32
    %69 = vector.broadcast %cst_65 : f32 to vector<1x8xf32>
    %70 = arith.addf %66, %69 : vector<1x8xf32>
    %71 = math.rsqrt %70 : vector<1x8xf32>
    %72 = vector.broadcast %71 : vector<1x8xf32> to vector<128x8xf32>
    %73 = arith.mulf %68, %72 : vector<128x8xf32>
    %74 = vector.broadcast %54 : vector<1x8xf32> to vector<128x8xf32>
    %75 = arith.mulf %73, %74 : vector<128x8xf32>
    %76 = vector.broadcast %55 : vector<1x8xf32> to vector<128x8xf32>
    %77 = arith.addf %75, %76 : vector<128x8xf32>
    %78 = vector.extract_strided_slice %0 {offsets = [0, 0, 8], sizes = [2, 64, 8], strides = [1, 1, 1]} : vector<2x64x16xf32> to vector<2x64x8xf32>
    %79 = vector.shape_cast %78 : vector<2x64x8xf32> to vector<128x8xf32>
    %c0_66 = arith.constant 0 : index
    %c0_67 = arith.constant 0 : index
    %80 = vector.load %arg6[%c0_66, %c0_67] : memref<1x8xf32, #tpu.memory_space<vmem>>, vector<1x8xf32>
    %c0_68 = arith.constant 0 : index
    %c0_69 = arith.constant 0 : index
    %81 = vector.load %arg7[%c0_68, %c0_69] : memref<1x8xf32, #tpu.memory_space<vmem>>, vector<1x8xf32>
    %cst_70 = arith.constant dense<0.000000e+00> : vector<8xf32>
    %82 = vector.multi_reduction <add>, %79, %cst_70 [0] : vector<128x8xf32> to vector<8xf32>
    %83 = vector.shape_cast %82 : vector<8xf32> to vector<1x8xf32>
    %cst_71 = arith.constant 1.280000e+02 : f32
    %84 = vector.broadcast %cst_71 : f32 to vector<1x8xf32>
    %85 = arith.divf %83, %84 : vector<1x8xf32>
    %86 = vector.broadcast %85 : vector<1x8xf32> to vector<128x8xf32>
    %87 = arith.subf %79, %86 : vector<128x8xf32>
    %88 = arith.mulf %87, %87 : vector<128x8xf32>
    %cst_72 = arith.constant dense<0.000000e+00> : vector<8xf32>
    %89 = vector.multi_reduction <add>, %88, %cst_72 [0] : vector<128x8xf32> to vector<8xf32>
    %90 = vector.shape_cast %89 : vector<8xf32> to vector<1x8xf32>
    %cst_73 = arith.constant 1.280000e+02 : f32
    %91 = vector.broadcast %cst_73 : f32 to vector<1x8xf32>
    %92 = arith.divf %90, %91 : vector<1x8xf32>
    %93 = vector.broadcast %85 : vector<1x8xf32> to vector<128x8xf32>
    %94 = arith.subf %79, %93 : vector<128x8xf32>
    %cst_74 = arith.constant 9.99999974E-6 : f32
    %95 = vector.broadcast %cst_74 : f32 to vector<1x8xf32>
    %96 = arith.addf %92, %95 : vector<1x8xf32>
    %97 = math.rsqrt %96 : vector<1x8xf32>
    %98 = vector.broadcast %97 : vector<1x8xf32> to vector<128x8xf32>
    %99 = arith.mulf %94, %98 : vector<128x8xf32>
    %100 = vector.broadcast %80 : vector<1x8xf32> to vector<128x8xf32>
    %101 = arith.mulf %99, %100 : vector<128x8xf32>
    %102 = vector.broadcast %81 : vector<1x8xf32> to vector<128x8xf32>
    %103 = arith.addf %101, %102 : vector<128x8xf32>
    %104 = arith.addf %77, %103 : vector<128x8xf32>
    %cst_75 = arith.constant 0.000000e+00 : f32
    %105 = vector.broadcast %cst_75 : f32 to vector<128x8xf32>
    %106 = arith.maximumf %104, %105 : vector<128x8xf32>
    %107 = vector.shape_cast %106 : vector<128x8xf32> to vector<2x8x8x8xf32>
    %c0_76 = arith.constant 0 : index
    %c0_77 = arith.constant 0 : index
    %c0_78 = arith.constant 0 : index
    %c0_79 = arith.constant 0 : index
    %108 = vector.load %arg8[%c0_76, %c0_77, %c0_78, %c0_79] : memref<2x8x8x8xf32, #tpu.memory_space<vmem>>, vector<2x8x8x8xf32>
    tpu.vector_store %arg8[%c0_76, %c0_77, %c0_78, %c0_79], %107 {strides = array<i32>} : memref<2x8x8x8xf32, #tpu.memory_space<vmem>>, vector<2x8x8x8xf32>,
    return
  }
}

module attributes {stable_mosaic.version = 11 : i64} {
  func.func @kernel(%arg0: i32, %arg1: memref<1x36x9x4xf32, #tpu.memory_space<vmem>>, %arg2: memref<36x16xf32, #tpu.memory_space<vmem>>, %arg3: memref<1x64x16xf32, #tpu.memory_space<vmem>>) attributes {dimension_semantics = [#tpu.dimension_semantics<parallel>], iteration_bounds = array<i64: 2>, scalar_prefetch = 0 : i64, scratch_operands = 0 : i64, tpu.core_type = #tpu.core_type<tc>, window_params = [{transform_indices = @transform_0, window_bounds = array<i64: 1, 36, 9, 4>}, {pipeline_mode = #tpu.pipeline_mode<synchronous>, transform_indices = @transform_1, window_bounds = array<i64: 36, 16>}, {transform_indices = @transform_2, window_bounds = array<i64: 1, 64, 16>}]} {
    %c0 = arith.constant 0 : index
    %c0_0 = arith.constant 0 : index
    %c0_1 = arith.constant 0 : index
    %c0_2 = arith.constant 0 : index
    %0 = vector.load %arg1[%c0, %c0_0, %c0_1, %c0_2] : memref<1x36x9x4xf32, #tpu.memory_space<vmem>>, vector<1x36x9x4xf32>
    %1 = vector.shape_cast %0 : vector<1x36x9x4xf32> to vector<36x9x4xf32>
    %2 = vector.extract_strided_slice %1 {offsets = [0, 0, 0], sizes = [8, 8, 4], strides = [1, 1, 1]} : vector<36x9x4xf32> to vector<8x8x4xf32>
    %3 = vector.shape_cast %2 : vector<8x8x4xf32> to vector<64x4xf32>
    %4 = vector.extract_strided_slice %1 {offsets = [9, 0, 0], sizes = [8, 8, 4], strides = [1, 1, 1]} : vector<36x9x4xf32> to vector<8x8x4xf32>
    %5 = vector.shape_cast %4 : vector<8x8x4xf32> to vector<64x4xf32>
    %6 = vector.extract_strided_slice %1 {offsets = [0, 1, 0], sizes = [8, 8, 4], strides = [1, 1, 1]} : vector<36x9x4xf32> to vector<8x8x4xf32>
    %7 = vector.shape_cast %6 : vector<8x8x4xf32> to vector<64x4xf32>
    %8 = vector.extract_strided_slice %1 {offsets = [18, 0, 0], sizes = [8, 8, 4], strides = [1, 1, 1]} : vector<36x9x4xf32> to vector<8x8x4xf32>
    %9 = vector.shape_cast %8 : vector<8x8x4xf32> to vector<64x4xf32>
    %10 = vector.extract_strided_slice %1 {offsets = [27, 0, 0], sizes = [8, 8, 4], strides = [1, 1, 1]} : vector<36x9x4xf32> to vector<8x8x4xf32>
    %11 = vector.shape_cast %10 : vector<8x8x4xf32> to vector<64x4xf32>
    %12 = vector.extract_strided_slice %1 {offsets = [18, 1, 0], sizes = [8, 8, 4], strides = [1, 1, 1]} : vector<36x9x4xf32> to vector<8x8x4xf32>
    %13 = vector.shape_cast %12 : vector<8x8x4xf32> to vector<64x4xf32>
    %14 = vector.extract_strided_slice %1 {offsets = [1, 0, 0], sizes = [8, 8, 4], strides = [1, 1, 1]} : vector<36x9x4xf32> to vector<8x8x4xf32>
    %15 = vector.shape_cast %14 : vector<8x8x4xf32> to vector<64x4xf32>
    %16 = vector.extract_strided_slice %1 {offsets = [10, 0, 0], sizes = [8, 8, 4], strides = [1, 1, 1]} : vector<36x9x4xf32> to vector<8x8x4xf32>
    %17 = vector.shape_cast %16 : vector<8x8x4xf32> to vector<64x4xf32>
    %18 = vector.extract_strided_slice %1 {offsets = [1, 1, 0], sizes = [8, 8, 4], strides = [1, 1, 1]} : vector<36x9x4xf32> to vector<8x8x4xf32>
    %19 = vector.shape_cast %18 : vector<8x8x4xf32> to vector<64x4xf32>
    %20 = tpu.concatenate %3, %5, %7, %9, %11, %13, %15, %17, %19 in 1 : vector<64x4xf32>, vector<64x4xf32>, vector<64x4xf32>, vector<64x4xf32>, vector<64x4xf32>, vector<64x4xf32>, vector<64x4xf32>, vector<64x4xf32>, vector<64x4xf32> -> vector<64x36xf32>
    %c0_3 = arith.constant 0 : index
    %c0_4 = arith.constant 0 : index
    %21 = vector.load %arg2[%c0_3, %c0_4] : memref<36x16xf32, #tpu.memory_space<vmem>>, vector<36x16xf32>
    %cst = arith.constant dense<0.000000e+00> : vector<64x16xf32>
    %22 = tpu.matmul %20, %21, %cst {dimension_numbers = #tpu.dot_dimension_numbers<[1], [0], [0], [1], [0, 0, 1, 1], [], []>} : vector<64x36xf32>, vector<36x16xf32>, vector<64x16xf32> -> vector<64x16xf32>
    %c0_5 = arith.constant 0 : index
    %c0_6 = arith.constant 0 : index
    %c0_7 = arith.constant 0 : index
    %23 = vector.load %arg3[%c0_5, %c0_6, %c0_7] : memref<1x64x16xf32, #tpu.memory_space<vmem>>, vector<1x64x16xf32>
    %24 = vector.shape_cast %23 : vector<1x64x16xf32> to vector<64x16xf32>
    %25 = vector.shape_cast %22 : vector<64x16xf32> to vector<1x64x16xf32>
    tpu.vector_store %arg3[%c0_5, %c0_6, %c0_7], %25 {strides = array<i32>} : memref<1x64x16xf32, #tpu.memory_space<vmem>>, vector<1x64x16xf32>,
    return
  }
  func.func @transform_0(%arg0: i32) -> (i32, i32, i32, i32) {
    %c0_i32 = arith.constant 0 : i32
    %c0_i32_0 = arith.constant 0 : i32
    %c0_i32_1 = arith.constant 0 : i32
    %c0_i32_2 = arith.constant 0 : i32
    return %arg0, %c0_i32, %c0_i32_0, %c0_i32_1 : i32, i32, i32, i32
  }
  func.func @transform_1(%arg0: i32) -> (i32, i32) {
    %c0_i32 = arith.constant 0 : i32
    %c0_i32_0 = arith.constant 0 : i32
    %c0_i32_1 = arith.constant 0 : i32
    return %c0_i32, %c0_i32_0 : i32, i32
  }
  func.func @transform_2(%arg0: i32) -> (i32, i32, i32) {
    %c0_i32 = arith.constant 0 : i32
    %c0_i32_0 = arith.constant 0 : i32
    %c0_i32_1 = arith.constant 0 : i32
    return %arg0, %c0_i32, %c0_i32_0 : i32, i32, i32
  }
}

</mosaic_0001>

<llo_original>
// kernel: res_block_forward.2
$region0: #{res_block_forward.2}
  #allocation0 [shape = 'u32[]', space=smem, size = 0x4, offset = 0x4, fixed_abs, tag = 'smem constant byte address 0x4 - core index']
  #allocation1 [shape = 'u32[72,128]{1,0:T(1,128)}', space=vmem, size = 0x9000, scoped, tag = 'internal scratch']
  %s0 = inlined_call_operand.vmem [shape: f32[2,36,9,4], index: 0, kind: input, shape index: {}]
  %s1 = inlined_call_operand.vmem [shape: f32[36,16], index: 1, kind: input, shape index: {}]
  %s2 = inlined_call_operand.vmem [shape: f32[2,64,16], index: 2, kind: output, shape index: {}]
  %s3 = sld [smem:[#allocation0]]
  $region41: #{res_block_forward.2} parent=0
    _
  %s5 = ssub.s32 1, %s3
  %s6 = scalar_select 0, %s5, %s3
  loop: start=0, step=1, limit=4
  $region2: #{res_block_forward.2} parent=0 // loop_pre_header
    _
  $region3: #{res_block_forward.2} parent=0 // loop_header
    %s8 = sphi 0, %s12
    %p9 = scmp.ge.s32.totalorder %s8, 4
    %s18 = sphi 0, %s20
    %s21 = sphi 0, %s18
    %s22 = sphi 0, %s21
    %s38 = sphi 0, %s22
    %s42 = sphi 0, %s42
    %s44 = sphi 0, %s42
    %s45 = sphi 0, %s44
    %s59 = sphi 0, %s45
    %s65 = sphi 0, %s67
    %s68 = sphi 0, %s65
    %s69 = sphi 0, %s68
    %s85 = sphi 0, %s69
  $region4: #{res_block_forward.2} parent=0 // loop_header_branch
    %11 = sbr.rel (%p9) target = $region8
  $region5: #{res_block_forward.2} parent=0 // loop_body
    %s13 = ssub.s32 %s8, 1
    %s14 = ssub.s32 %s8, 2
    %s15 = sadd.s32 %s8, 1
    %s16 = ssub.s32 %s8, %s15
    %p17 = scmp.eq.s32.totalorder %s16, 0
    %s19 = sadd.s32 %s18, 1
    %s20 = scalar_select %p17, %s18, %s19
    %p23 = pneg %p17
    %p24 = scmp.eq.s32.totalorder %s8, 1
    %p25 = por %p23, %p24
    %p26 = scmp.ne.s32.totalorder %s18, %s21
    %p27 = scmp.eq.s32.totalorder %s8, 0
    %p28 = por %p26, %p27
    %p29 = scmp.ne.s32.totalorder %s18, %s21
    %p30 = scmp.eq.s32.totalorder %s13, 1
    %p31 = por %p29, %p30
    %p32 = scmp.ne.s32.totalorder %s21, %s22
    %p33 = scmp.eq.s32.totalorder %s13, 0
    %p34 = por %p32, %p33
    %p35 = scmp.ne.s32.totalorder %s21, %s22
    %p36 = scmp.eq.s32.totalorder %s14, 1
    %p37 = por %p35, %p36
    %p39 = scmp.ne.s32.totalorder %s22, %s38
    %p40 = scmp.eq.s32.totalorder %s14, 0
    %p41 = por %p39, %p40
    %s43 = sadd.s32 %s42, 1
    %p46 = scmp.eq.s32.totalorder %s8, 1
    %p47 = scmp.ne.s32.totalorder %s42, %s44
    %p48 = scmp.eq.s32.totalorder %s8, 0
    %p49 = por %p47, %p48
    %p50 = scmp.ne.s32.totalorder %s42, %s44
    %p51 = scmp.eq.s32.totalorder %s13, 1
    %p52 = por %p50, %p51
    %p53 = scmp.ne.s32.totalorder %s44, %s45
    %p54 = scmp.eq.s32.totalorder %s13, 0
    %p55 = por %p53, %p54
    %p56 = scmp.ne.s32.totalorder %s44, %s45
    %p57 = scmp.eq.s32.totalorder %s14, 1
    %p58 = por %p56, %p57
    %p60 = scmp.ne.s32.totalorder %s45, %s59
    %p61 = scmp.eq.s32.totalorder %s14, 0
    %p62 = por %p60, %p61
    %s63 = ssub.s32 %s8, %s15
    %p64 = scmp.eq.s32.totalorder %s63, 0
    %s66 = sadd.s32 %s65, 1
    %s67 = scalar_select %p64, %s65, %s66
    %p70 = pneg %p64
    %p71 = scmp.eq.s32.totalorder %s8, 1
    %p72 = por %p70, %p71
    %p73 = scmp.ne.s32.totalorder %s65, %s68
    %p74 = scmp.eq.s32.totalorder %s8, 0
    %p75 = por %p73, %p74
    %p76 = scmp.ne.s32.totalorder %s65, %s68
    %p77 = scmp.eq.s32.totalorder %s13, 1
    %p78 = por %p76, %p77
    %p79 = scmp.ne.s32.totalorder %s68, %s69
    %p80 = scmp.eq.s32.totalorder %s13, 0
    %p81 = por %p79, %p80
    %p82 = scmp.ne.s32.totalorder %s68, %s69
    %p83 = scmp.eq.s32.totalorder %s14, 1
    %p84 = por %p82, %p83
    %p86 = scmp.ne.s32.totalorder %s69, %s85
    %p87 = scmp.eq.s32.totalorder %s14, 0
    %p88 = por %p86, %p87
    %p89 = scmp.le.s32.totalorder 1, %s8
    %p90 = scmp.lt.s32.totalorder %s8, 3
    %p91 = pnand %p89, %p90
    %p92 = pneg %p91
    // Predicated region
    $region9: #{res_block_forward.2} parent=5 // pred_check
      _
    $region10: #{res_block_forward.2} parent=5 // pred_check_branch
      %94 = sbr.rel (%p91) target = $region12
    $region11: #{res_block_forward.2} parent=5 // pred_region
      %s95 = ssub.s32 %s8, 1
      // Predicated region
      $region13: #{res_block_forward.2} parent=11 // pred_check
        %p96 = pneg %p55
      $region14: #{res_block_forward.2} parent=11 // pred_check_branch
        %98 = sbr.rel (%p96) target = $region16
      $region15: #{res_block_forward.2} parent=11 // pred_region
        _
      $region16: #{res_block_forward.2} parent=11 // pred_fallthru
        _
    $region12: #{res_block_forward.2} parent=5 // pred_fallthru
      _
    %p99 = scmp.lt.s32.totalorder %s8, 2
    // Predicated region
    $region17: #{res_block_forward.2} parent=5 // pred_check
      %p100 = pneg %p99
    $region18: #{res_block_forward.2} parent=5 // pred_check_branch
      %102 = sbr.rel (%p100) target = $region20
    $region19: #{res_block_forward.2} parent=5 // pred_region
      // Predicated region
      $region21: #{res_block_forward.2} parent=19 // pred_check
        %p103 = pneg %p28
      $region22: #{res_block_forward.2} parent=19 // pred_check_branch
        %105 = sbr.rel (%p103) target = $region24
      $region23: #{res_block_forward.2} parent=19 // pred_region
        %p106 = scmp.lt.s32.totalorder %s8, 1
        %s107 = scalar_select %p106, %s8, 1
        %s108 = smul.addr %s107, 72
        %s109 = smul.addr %s108, 8
        %s110 = scalar_lea.vmem %s0, %s109
      $region24: #{res_block_forward.2} parent=19 // pred_fallthru
        _
    $region20: #{res_block_forward.2} parent=5 // pred_fallthru
      _
    %p111 = scmp.le.s32.totalorder 1, %s8
    %p112 = scmp.lt.s32.totalorder %s8, 3
    %p113 = pnand %p111, %p112
    %p114 = pneg %p113
    // Predicated region
    $region25: #{res_block_forward.2} parent=5 // pred_check
      _
    $region26: #{res_block_forward.2} parent=5 // pred_check_branch
      %116 = sbr.rel (%p113) target = $region28
    $region27: #{res_block_forward.2} parent=5 // pred_region
      %s117 = ssub.s32 %s8, 1
      %p118 = scmp.lt.s32.totalorder %s13, 1
      %s119 = scalar_select %p118, %s13, 1
      %s120 = smul.addr %s119, 72
      %s121 = smul.addr %s120, 8
      %s122 = scalar_lea.vmem %s0, %s121
      %p123 = pneg %p34
      %p124 = pneg %p31
      %p125 = pneg %p55
      %p126 = pneg %p52
      %p127 = pneg %p81
      %p128 = pneg %p78
      %p129 = scmp.lt.s32.totalorder %s13, 1
      %s130 = scalar_select %p129, %s13, 1
      %s131 = smul.addr %s130, 8
      %s132 = smul.addr %s131, 8
      %s133 = scalar_lea.vmem %s2, %s132
      %p134 = scmp.lt.s32.totalorder %s13, 1
      %s135 = scalar_select %p134, %s13, 1
      %s136 = smul.addr %s135, 72
      %s137 = smul.addr %s136, 8
      %s138 = scalar_lea.vmem %s0, %s137
      %p139 = scmp.lt.s32.totalorder %s13, 1
      %s140 = scalar_select %p139, %s13, 1
      %s141 = smul.addr %s140, 8
      %s142 = smul.addr %s141, 8
      %s143 = scalar_lea.vmem %s2, %s142
      %v144 = vld [vmem:[%s138] sm:$0xff]
      %v145 = vld [vmem:[%s138 + $0x8] sm:$0x1]
      %v146 = vld [vmem:[%s138 + $0x10] sm:$0xff]
      %v147 = vld [vmem:[%s138 + $0x18] sm:$0x1]
      %v148 = vld [vmem:[%s138 + $0x20] sm:$0xff]
      %v149 = vld [vmem:[%s138 + $0x28] sm:$0x1]
      %v150 = vld [vmem:[%s138 + $0x30] sm:$0xff]
      %v151 = vld [vmem:[%s138 + $0x38] sm:$0x1]
      %v152 = vld [vmem:[%s138 + $0x40] sm:$0xff]
      %v153 = vld [vmem:[%s138 + $0x48] sm:$0x1]
      %v154 = vld [vmem:[%s138 + $0x50] sm:$0xff]
      %v155 = vld [vmem:[%s138 + $0x58] sm:$0x1]
      %v156 = vld [vmem:[%s138 + $0x60] sm:$0xff]
      %v157 = vld [vmem:[%s138 + $0x68] sm:$0x1]
      %v158 = vld [vmem:[%s138 + $0x70] sm:$0xff]
      %v159 = vld [vmem:[%s138 + $0x78] sm:$0x1]
      %v160 = vld [vmem:[%s138 + $0x80] sm:$0xff]
      %v161 = vld [vmem:[%s138 + $0x88] sm:$0x1]
      %v162 = vld [vmem:[%s138 + $0x90] sm:$0xff]
      %v163 = vld [vmem:[%s138 + $0xa0] sm:$0xff]
      %v164 = vld [vmem:[%s138 + $0xb0] sm:$0xff]
      %v165 = vld [vmem:[%s138 + $0xc0] sm:$0xff]
      %v166 = vld [vmem:[%s138 + $0xd0] sm:$0xff]
      %v167 = vld [vmem:[%s138 + $0xe0] sm:$0xff]
      %v168 = vld [vmem:[%s138 + $0xf0] sm:$0xff]
      %v169 = vld [vmem:[%s138 + $0x100] sm:$0xff]
      %v170 = vld [vmem:[%s138 + $0x110] sm:$0xff]
      %v171 = vld [vmem:[%s138 + $0x120] sm:$0xff]
      %v172 = vld [vmem:[%s138 + $0x128] sm:$0x1]
      %v173 = vld [vmem:[%s138 + $0x130] sm:$0xff]
      %v174 = vld [vmem:[%s138 + $0x138] sm:$0x1]
      %v175 = vld [vmem:[%s138 + $0x140] sm:$0xff]
      %v176 = vld [vmem:[%s138 + $0x148] sm:$0x1]
      %v177 = vld [vmem:[%s138 + $0x150] sm:$0xff]
      %v178 = vld [vmem:[%s138 + $0x158] sm:$0x1]
      %v179 = vld [vmem:[%s138 + $0x160] sm:$0xff]
      %v180 = vld [vmem:[%s138 + $0x168] sm:$0x1]
      %v181 = vld [vmem:[%s138 + $0x170] sm:$0xff]
      %v182 = vld [vmem:[%s138 + $0x178] sm:$0x1]
      %v183 = vld [vmem:[%s138 + $0x180] sm:$0xff]
      %v184 = vld [vmem:[%s138 + $0x188] sm:$0x1]
      %v185 = vld [vmem:[%s138 + $0x190] sm:$0xff]
      %v186 = vld [vmem:[%s138 + $0x198] sm:$0x1]
      %v187 = vld [vmem:[%s138 + $0x1b0] sm:$0xff]
      %v188 = vld [vmem:[%s138 + $0x1c0] sm:$0xff]
      %v189 = vld [vmem:[%s138 + $0x1d0] sm:$0xff]
      %v190 = vld [vmem:[%s138 + $0x1e0] sm:$0xff]
      %v191 = vld [vmem:[%s138 + $0x1f0] sm:$0xff]
      %v192 = vld [vmem:[%s138 + $0x200] sm:$0xff]
      %v193 = vld [vmem:[%s138 + $0x210] sm:$0xff]
      %v194 = vld [vmem:[%s138 + $0x220] sm:$0xff]
      %vm211 = vcmask 1046528
      %v212 = vrot.slane %v144, 1
      %v213 = vrot.slane %v145, 1
      %v214 = vsel %vm211, %v212, %v213
      %v215 = vrot.slane %v146, 1
      %v216 = vrot.slane %v147, 1
      %v217 = vsel %vm211, %v215, %v216
      %v218 = vrot.slane %v148, 1
      %v219 = vrot.slane %v149, 1
      %v220 = vsel %vm211, %v218, %v219
      %v221 = vrot.slane %v150, 1
      %v222 = vrot.slane %v151, 1
      %v223 = vsel %vm211, %v221, %v222
      %v224 = vrot.slane %v152, 1
      %v225 = vrot.slane %v153, 1
      %v226 = vsel %vm211, %v224, %v225
      %v227 = vrot.slane %v154, 1
      %v228 = vrot.slane %v155, 1
      %v229 = vsel %vm211, %v227, %v228
      %v230 = vrot.slane %v156, 1
      %v231 = vrot.slane %v157, 1
      %v232 = vsel %vm211, %v230, %v231
      %v233 = vrot.slane %v158, 1
      %v234 = vrot.slane %v159, 1
      %v235 = vsel %vm211, %v233, %v234
      %v252 = vrot.slane %v171, 1
      %v253 = vrot.slane %v172, 1
      %v254 = vsel %vm211, %v252, %v253
      %v255 = vrot.slane %v173, 1
      %v256 = vrot.slane %v174, 1
      %v257 = vsel %vm211, %v255, %v256
      %v258 = vrot.slane %v175, 1
      %v259 = vrot.slane %v176, 1
      %v260 = vsel %vm211, %v258, %v259
      %v261 = vrot.slane %v177, 1
      %v262 = vrot.slane %v178, 1
      %v263 = vsel %vm211, %v261, %v262
      %v264 = vrot.slane %v179, 1
      %v265 = vrot.slane %v180, 1
      %v266 = vsel %vm211, %v264, %v265
      %v267 = vrot.slane %v181, 1
      %v268 = vrot.slane %v182, 1
      %v269 = vsel %vm211, %v267, %v268
      %v270 = vrot.slane %v183, 1
      %v271 = vrot.slane %v184, 1
      %v272 = vsel %vm211, %v270, %v271
      %v273 = vrot.slane %v185, 1
      %v274 = vrot.slane %v186, 1
      %v275 = vsel %vm211, %v273, %v274
      %v278 = vrot.slane %v160, 1
      %v279 = vrot.slane %v161, 1
      %v280 = vsel %vm211, %v278, %v279
      %289 = vrot.lane.b32.xlu0 %v162, 4
      %v290 = vpop.permute.xlu0 %289
      %291 = vrot.lane.b32.xlu0 %v163, 4
      %v292 = vpop.permute.xlu0 %291
      %293 = vrot.lane.b32.xlu0 %v164, 4
      %v294 = vpop.permute.xlu0 %293
      %295 = vrot.lane.b32.xlu0 %v165, 4
      %v296 = vpop.permute.xlu0 %295
      %297 = vrot.lane.b32.xlu0 %v166, 4
      %v298 = vpop.permute.xlu0 %297
      %299 = vrot.lane.b32.xlu0 %v167, 4
      %v300 = vpop.permute.xlu0 %299
      %301 = vrot.lane.b32.xlu0 %v168, 4
      %v302 = vpop.permute.xlu0 %301
      %303 = vrot.lane.b32.xlu0 %v169, 4
      %v304 = vpop.permute.xlu0 %303
      %313 = vrot.lane.b32.xlu0 %v214, 8
      %v314 = vpop.permute.xlu0 %313
      %315 = vrot.lane.b32.xlu0 %v217, 8
      %v316 = vpop.permute.xlu0 %315
      %317 = vrot.lane.b32.xlu0 %v220, 8
      %v318 = vpop.permute.xlu0 %317
      %319 = vrot.lane.b32.xlu0 %v223, 8
      %v320 = vpop.permute.xlu0 %319
      %321 = vrot.lane.b32.xlu0 %v226, 8
      %v322 = vpop.permute.xlu0 %321
      %323 = vrot.lane.b32.xlu0 %v229, 8
      %v324 = vpop.permute.xlu0 %323
      %325 = vrot.lane.b32.xlu0 %v232, 8
      %v326 = vpop.permute.xlu0 %325
      %327 = vrot.lane.b32.xlu0 %v235, 8
      %v328 = vpop.permute.xlu0 %327
      %337 = vrot.lane.b32.xlu0 %v171, 12
      %v338 = vpop.permute.xlu0 %337
      %339 = vrot.lane.b32.xlu0 %v173, 12
      %v340 = vpop.permute.xlu0 %339
      %341 = vrot.lane.b32.xlu0 %v175, 12
      %v342 = vpop.permute.xlu0 %341
      %343 = vrot.lane.b32.xlu0 %v177, 12
      %v344 = vpop.permute.xlu0 %343
      %345 = vrot.lane.b32.xlu0 %v179, 12
      %v346 = vpop.permute.xlu0 %345
      %347 = vrot.lane.b32.xlu0 %v181, 12
      %v348 = vpop.permute.xlu0 %347
      %349 = vrot.lane.b32.xlu0 %v183, 12
      %v350 = vpop.permute.xlu0 %349
      %351 = vrot.lane.b32.xlu0 %v185, 12
      %v352 = vpop.permute.xlu0 %351
      %369 = vrot.lane.b32.xlu0 %v187, 16
      %v370 = vpop.permute.xlu0 %369
      %371 = vrot.lane.b32.xlu0 %v188, 16
      %v372 = vpop.permute.xlu0 %371
      %373 = vrot.lane.b32.xlu0 %v189, 16
      %v374 = vpop.permute.xlu0 %373
      %375 = vrot.lane.b32.xlu0 %v190, 16
      %v376 = vpop.permute.xlu0 %375
      %377 = vrot.lane.b32.xlu0 %v191, 16
      %v378 = vpop.permute.xlu0 %377
      %379 = vrot.lane.b32.xlu0 %v192, 16
      %v380 = vpop.permute.xlu0 %379
      %381 = vrot.lane.b32.xlu0 %v193, 16
      %v382 = vpop.permute.xlu0 %381
      %383 = vrot.lane.b32.xlu0 %v194, 16
      %v384 = vpop.permute.xlu0 %383
      %393 = vrot.lane.b32.xlu0 %v254, 20
      %v394 = vpop.permute.xlu0 %393
      %395 = vrot.lane.b32.xlu0 %v257, 20
      %v396 = vpop.permute.xlu0 %395
      %397 = vrot.lane.b32.xlu0 %v260, 20
      %v398 = vpop.permute.xlu0 %397
      %399 = vrot.lane.b32.xlu0 %v263, 20
      %v400 = vpop.permute.xlu0 %399
      %401 = vrot.lane.b32.xlu0 %v266, 20
      %v402 = vpop.permute.xlu0 %401
      %403 = vrot.lane.b32.xlu0 %v269, 20
      %v404 = vpop.permute.xlu0 %403
      %405 = vrot.lane.b32.xlu0 %v272, 20
      %v406 = vpop.permute.xlu0 %405
      %407 = vrot.lane.b32.xlu0 %v275, 20
      %v408 = vpop.permute.xlu0 %407
      %417 = vrot.lane.b32.xlu0 %v146, 24
      %v418 = vpop.permute.xlu0 %417
      %419 = vrot.lane.b32.xlu0 %v148, 24
      %v420 = vpop.permute.xlu0 %419
      %421 = vrot.lane.b32.xlu0 %v150, 24
      %v422 = vpop.permute.xlu0 %421
      %423 = vrot.lane.b32.xlu0 %v152, 24
      %v424 = vpop.permute.xlu0 %423
      %425 = vrot.lane.b32.xlu0 %v154, 24
      %v426 = vpop.permute.xlu0 %425
      %427 = vrot.lane.b32.xlu0 %v156, 24
      %v428 = vpop.permute.xlu0 %427
      %429 = vrot.lane.b32.xlu0 %v158, 24
      %v430 = vpop.permute.xlu0 %429
      %431 = vrot.lane.b32.xlu0 %v160, 24
      %v432 = vpop.permute.xlu0 %431
      %442 = vrot.lane.b32.xlu0 %v163, 28
      %v443 = vpop.permute.xlu0 %442
      %444 = vrot.lane.b32.xlu0 %v164, 28
      %v445 = vpop.permute.xlu0 %444
      %446 = vrot.lane.b32.xlu0 %v165, 28
      %v447 = vpop.permute.xlu0 %446
      %448 = vrot.lane.b32.xlu0 %v166, 28
      %v449 = vpop.permute.xlu0 %448
      %450 = vrot.lane.b32.xlu0 %v167, 28
      %v451 = vpop.permute.xlu0 %450
      %452 = vrot.lane.b32.xlu0 %v168, 28
      %v453 = vpop.permute.xlu0 %452
      %454 = vrot.lane.b32.xlu0 %v169, 28
      %v455 = vpop.permute.xlu0 %454
      %456 = vrot.lane.b32.xlu0 %v170, 28
      %v457 = vpop.permute.xlu0 %456
      %466 = vrot.lane.b32.xlu0 %v217, 32
      %v467 = vpop.permute.xlu0 %466
      %468 = vrot.lane.b32.xlu0 %v220, 32
      %v469 = vpop.permute.xlu0 %468
      %470 = vrot.lane.b32.xlu0 %v223, 32
      %v471 = vpop.permute.xlu0 %470
      %472 = vrot.lane.b32.xlu0 %v226, 32
      %v473 = vpop.permute.xlu0 %472
      %474 = vrot.lane.b32.xlu0 %v229, 32
      %v475 = vpop.permute.xlu0 %474
      %476 = vrot.lane.b32.xlu0 %v232, 32
      %v477 = vpop.permute.xlu0 %476
      %478 = vrot.lane.b32.xlu0 %v235, 32
      %v479 = vpop.permute.xlu0 %478
      %480 = vrot.lane.b32.xlu0 %v280, 32
      %v481 = vpop.permute.xlu0 %480
      %vm490 = vcmask 31744
      %v491 = vsel %vm490, %v144, %v290
      %v492 = vsel %vm490, %v146, %v292
      %v493 = vsel %vm490, %v148, %v294
      %v494 = vsel %vm490, %v150, %v296
      %v495 = vsel %vm490, %v152, %v298
      %v496 = vsel %vm490, %v154, %v300
      %v497 = vsel %vm490, %v156, %v302
      %v498 = vsel %vm490, %v158, %v304
      %vm499 = vcmask 64512
      %v500 = vsel %vm499, %v491, %v314
      %v501 = vsel %vm499, %v492, %v316
      %v502 = vsel %vm499, %v493, %v318
      %v503 = vsel %vm499, %v494, %v320
      %v504 = vsel %vm499, %v495, %v322
      %v505 = vsel %vm499, %v496, %v324
      %v506 = vsel %vm499, %v497, %v326
      %v507 = vsel %vm499, %v498, %v328
      %vm508 = vcmask 97280
      %v509 = vsel %vm508, %v500, %v338
      %v510 = vsel %vm508, %v501, %v340
      %v511 = vsel %vm508, %v502, %v342
      %v512 = vsel %vm508, %v503, %v344
      %v513 = vsel %vm508, %v504, %v346
      %v514 = vsel %vm508, %v505, %v348
      %v515 = vsel %vm508, %v506, %v350
      %v516 = vsel %vm508, %v507, %v352
      %vm517 = vcmask 130048
      %v518 = vsel %vm517, %v509, %v370
      %v519 = vsel %vm517, %v510, %v372
      %v520 = vsel %vm517, %v511, %v374
      %v521 = vsel %vm517, %v512, %v376
      %v522 = vsel %vm517, %v513, %v378
      %v523 = vsel %vm517, %v514, %v380
      %v524 = vsel %vm517, %v515, %v382
      %v525 = vsel %vm517, %v516, %v384
      %vm526 = vcmask 162816
      %v527 = vsel %vm526, %v518, %v394
      %v528 = vsel %vm526, %v519, %v396
      %v529 = vsel %vm526, %v520, %v398
      %v530 = vsel %vm526, %v521, %v400
      %v531 = vsel %vm526, %v522, %v402
      %v532 = vsel %vm526, %v523, %v404
      %v533 = vsel %vm526, %v524, %v406
      %v534 = vsel %vm526, %v525, %v408
      %vm535 = vcmask 195584
      %v536 = vsel %vm535, %v527, %v418
      %v537 = vsel %vm535, %v528, %v420
      %v538 = vsel %vm535, %v529, %v422
      %v539 = vsel %vm535, %v530, %v424
      %v540 = vsel %vm535, %v531, %v426
      %v541 = vsel %vm535, %v532, %v428
      %v542 = vsel %vm535, %v533, %v430
      %v543 = vsel %vm535, %v534, %v432
      %vm544 = vcmask 228352
      %v545 = vsel %vm544, %v536, %v443
      %v546 = vsel %vm544, %v537, %v445
      %v547 = vsel %vm544, %v538, %v447
      %v548 = vsel %vm544, %v539, %v449
      %v549 = vsel %vm544, %v540, %v451
      %v550 = vsel %vm544, %v541, %v453
      %v551 = vsel %vm544, %v542, %v455
      %v552 = vsel %vm544, %v543, %v457
      %vm553 = vcmask 261120
      %v554 = vsel %vm553, %v545, %v467
      %v555 = vsel %vm553, %v546, %v469
      %v556 = vsel %vm553, %v547, %v471
      %v557 = vsel %vm553, %v548, %v473
      %v558 = vsel %vm553, %v549, %v475
      %v559 = vsel %vm553, %v550, %v477
      %v560 = vsel %vm553, %v551, %v479
      %v561 = vsel %vm553, %v552, %v481
      %v562 = vld [vmem:[%s1] sm:$0xff]
      %v563 = vld [vmem:[%s1 + $0x8] sm:$0xff]
      %v564 = vld [vmem:[%s1 + $0x10] sm:$0xff]
      %v565 = vld [vmem:[%s1 + $0x18] sm:$0xff]
      %v566 = vld [vmem:[%s1 + $0x20] sm:$0xf]
      %vm567 = vcmask 293888
      %v569 = vsel %vm567, %v554, 0
      %v572 = vsel %vm567, %v555, 0
      %v575 = vsel %vm567, %v556, 0
      %v578 = vsel %vm567, %v557, 0
      %v581 = vsel %vm567, %v558, 0
      %v584 = vsel %vm567, %v559, 0
      %v587 = vsel %vm567, %v560, 0
      %v590 = vsel %vm567, %v561, 0
      %vm592 = vcmask 1043456
      %v594 = vsel %vm592, %v566, 0
      %596 = vmatpush.msra.mxu0 0.0
      %597 = vmatpush.msra.mxu0 0.0
      %598 = vmatpush.msra.mxu0 0.0
      %599 = vmatpush.msra.mxu0 0.0
      %600 = vmatpush.msra.mxu0 0.0
      %601 = vmatpush.msra.mxu0 0.0
      %602 = vmatpush.msra.mxu0 0.0
      %603 = vmatpush.msra.mxu0 0.0
      %604 = vmatpush.msra.mxu0 0.0
      %605 = vmatpush.msra.mxu0 0.0
      %606 = vmatpush.msra.mxu0 0.0
      %607 = vmatpush.msra.mxu0 %v594
      %608 = vmatpush.msra.mxu0 %v565
      %609 = vmatpush.msra.mxu0 %v564
      %610 = vmatpush.msra.mxu0 %v563
      %611 = vmatpush.msra.mxu0 %v562
      %612 = vmatmul.f32.gmra.mxu0 %v569
      %v613 = vpop.f32.mrf.mxu0
      %v614 = vadd.f32 0.0, %v613
      %615 = vmatmul.f32.gmra.mxu0 %v572
      %v616 = vpop.f32.mrf.mxu0
      %v617 = vadd.f32 0.0, %v616
      %618 = vmatmul.f32.gmra.mxu0 %v575
      %v619 = vpop.f32.mrf.mxu0
      %v620 = vadd.f32 0.0, %v619
      %621 = vmatmul.f32.gmra.mxu0 %v578
      %v622 = vpop.f32.mrf.mxu0
      %v623 = vadd.f32 0.0, %v622
      %624 = vmatmul.f32.gmra.mxu0 %v581
      %v625 = vpop.f32.mrf.mxu0
      %v626 = vadd.f32 0.0, %v625
      %627 = vmatmul.f32.gmra.mxu0 %v584
      %v628 = vpop.f32.mrf.mxu0
      %v629 = vadd.f32 0.0, %v628
      %630 = vmatmul.f32.gmra.mxu0 %v587
      %v631 = vpop.f32.mrf.mxu0
      %v632 = vadd.f32 0.0, %v631
      %633 = vmatmul.f32.gmra.mxu0 %v590
      %v634 = vpop.f32.mrf.mxu0
      %v635 = vadd.f32 0.0, %v634
      %636 = vdwg.mxu0
      %637 = vst.msk [vmem:[%s143] sm:$0xff] %vm517, %v614
      %638 = vst.msk [vmem:[%s143 + $0x8] sm:$0xff] %vm517, %v617
      %639 = vst.msk [vmem:[%s143 + $0x10] sm:$0xff] %vm517, %v620
      %640 = vst.msk [vmem:[%s143 + $0x18] sm:$0xff] %vm517, %v623
      %641 = vst.msk [vmem:[%s143 + $0x20] sm:$0xff] %vm517, %v626
      %642 = vst.msk [vmem:[%s143 + $0x28] sm:$0xff] %vm517, %v629
      %643 = vst.msk [vmem:[%s143 + $0x30] sm:$0xff] %vm517, %v632
      %644 = vst.msk [vmem:[%s143 + $0x38] sm:$0xff] %vm517, %v635
      %p645 = scmp.lt.s32.totalorder %s13, 1
      %s646 = scalar_select %p645, %s13, 1
      %s647 = smul.addr %s646, 8
      %s648 = smul.addr %s647, 8
      %s649 = scalar_lea.vmem %s2, %s648
      // Predicated region
      $region29: #{res_block_forward.2} parent=27 // pred_check
        %p650 = pneg %p78
      $region30: #{res_block_forward.2} parent=27 // pred_check_branch
        %652 = sbr.rel (%p650) target = $region32
      $region31: #{res_block_forward.2} parent=27 // pred_region
        _
      $region32: #{res_block_forward.2} parent=27 // pred_fallthru
        _
    $region28: #{res_block_forward.2} parent=5 // pred_fallthru
      _
    %p653 = scmp.le.s32.totalorder 2, %s8
    // Predicated region
    $region33: #{res_block_forward.2} parent=5 // pred_check
      %p654 = pneg %p653
    $region34: #{res_block_forward.2} parent=5 // pred_check_branch
      %656 = sbr.rel (%p654) target = $region36
    $region35: #{res_block_forward.2} parent=5 // pred_region
      %s657 = ssub.s32 %s8, 2
      // Predicated region
      $region37: #{res_block_forward.2} parent=35 // pred_check
        %p658 = pneg %p84
      $region38: #{res_block_forward.2} parent=35 // pred_check_branch
        %660 = sbr.rel (%p658) target = $region40
      $region39: #{res_block_forward.2} parent=35 // pred_region
        %p661 = scmp.lt.s32.totalorder %s14, 1
        %s662 = scalar_select %p661, %s14, 1
        %s663 = smul.addr %s662, 8
        %s664 = smul.addr %s663, 8
        %s665 = scalar_lea.vmem %s2, %s664
      $region40: #{res_block_forward.2} parent=35 // pred_fallthru
        _
    $region36: #{res_block_forward.2} parent=5 // pred_fallthru
      _
  $region6: #{res_block_forward.2} parent=0 // loop_footer
    %s12 = sadd.s32 1, %s8
  $region7: #{res_block_forward.2} parent=0 // loop_footer_branch
    %7 = sbr.rel target = $region3
  $region8: #{res_block_forward.2} parent=0 // loop_exit
    _

// kernel: res_block_forward.3
$region0: #{res_block_forward.3}
  #allocation0 [shape = 'u32[]', space=smem, size = 0x4, offset = 0x4, fixed_abs, tag = 'smem constant byte address 0x4 - core index']
  #allocation1 [shape = 'u32[72,128]{1,0:T(1,128)}', space=vmem, size = 0x9000, scoped, tag = 'internal scratch']
  #allocation2 [shape = 'f32[2,10,10,8]{3,2,1,0:T(8,128)}', space=vmem, size = 0x28000, scoped, tag = 'scratch operand']
  %s0 = inlined_call_operand.vmem [shape: f32[2,64,16], index: 0, kind: input, shape index: {}]
  %s1 = inlined_call_operand.vmem [shape: f32[72,8], index: 1, kind: input, shape index: {}]
  %s2 = inlined_call_operand.vmem [shape: f32[1,8], index: 2, kind: input, shape index: {}]
  %s3 = inlined_call_operand.vmem [shape: f32[1,8], index: 3, kind: input, shape index: {}]
  %s4 = inlined_call_operand.vmem [shape: f32[1,8], index: 4, kind: input, shape index: {}]
  %s5 = inlined_call_operand.vmem [shape: f32[1,8], index: 5, kind: input, shape index: {}]
  %s6 = inlined_call_operand.vmem [shape: f32[1,8], index: 6, kind: input, shape index: {}]
  %s7 = inlined_call_operand.vmem [shape: f32[1,8], index: 7, kind: input, shape index: {}]
  %s8 = inlined_call_operand.vmem [shape: f32[2,8,8,8], index: 8, kind: output, shape index: {}]
  %s9 = sld [smem:[#allocation0]]
  $region42: #{res_block_forward.3} parent=0
    _
  %s11 = ssub.s32 1, %s9
  %s12 = scalar_select 0, %s11, %s9
  // Predicated region
  $region2: #{res_block_forward.3} parent=0 // pred_check
    _
  $region3: #{res_block_forward.3} parent=0 // pred_check_branch
    %14 = sbr.rel (0) target = $region5
  $region4: #{res_block_forward.3} parent=0 // pred_region
    _
  $region5: #{res_block_forward.3} parent=0 // pred_fallthru
    _
  // Predicated region
  $region6: #{res_block_forward.3} parent=0 // pred_check
    _
  $region7: #{res_block_forward.3} parent=0 // pred_check_branch
    %16 = sbr.rel (0) target = $region9
  $region8: #{res_block_forward.3} parent=0 // pred_region
    _
  $region9: #{res_block_forward.3} parent=0 // pred_fallthru
    _
  // Predicated region
  $region10: #{res_block_forward.3} parent=0 // pred_check
    _
  $region11: #{res_block_forward.3} parent=0 // pred_check_branch
    %18 = sbr.rel (0) target = $region13
  $region12: #{res_block_forward.3} parent=0 // pred_region
    _
  $region13: #{res_block_forward.3} parent=0 // pred_fallthru
    _
  // Predicated region
  $region14: #{res_block_forward.3} parent=0 // pred_check
    _
  $region15: #{res_block_forward.3} parent=0 // pred_check_branch
    %20 = sbr.rel (0) target = $region17
  $region16: #{res_block_forward.3} parent=0 // pred_region
    _
  $region17: #{res_block_forward.3} parent=0 // pred_fallthru
    _
  // Predicated region
  $region18: #{res_block_forward.3} parent=0 // pred_check
    _
  $region19: #{res_block_forward.3} parent=0 // pred_check_branch
    %22 = sbr.rel (0) target = $region21
  $region20: #{res_block_forward.3} parent=0 // pred_region
    _
  $region21: #{res_block_forward.3} parent=0 // pred_fallthru
    _
  // Predicated region
  $region22: #{res_block_forward.3} parent=0 // pred_check
    _
  $region23: #{res_block_forward.3} parent=0 // pred_check_branch
    %24 = sbr.rel (0) target = $region25
  $region24: #{res_block_forward.3} parent=0 // pred_region
    _
  $region25: #{res_block_forward.3} parent=0 // pred_fallthru
    _
  // Predicated region
  $region26: #{res_block_forward.3} parent=0 // pred_check
    _
  $region27: #{res_block_forward.3} parent=0 // pred_check_branch
    %26 = sbr.rel (0) target = $region29
  $region28: #{res_block_forward.3} parent=0 // pred_region
    _
  $region29: #{res_block_forward.3} parent=0 // pred_fallthru
    _
  // Predicated region
  $region30: #{res_block_forward.3} parent=0 // pred_check
    _
  $region31: #{res_block_forward.3} parent=0 // pred_check_branch
    %28 = sbr.rel (0) target = $region33
  $region32: #{res_block_forward.3} parent=0 // pred_region
    _
  $region33: #{res_block_forward.3} parent=0 // pred_fallthru
    _
  %v29 = vld [vmem:[%s0] sm:$0xff]
  %v30 = vld [vmem:[%s0 + $0x8] sm:$0xff]
  %v31 = vld [vmem:[%s0 + $0x10] sm:$0xff]
  %v32 = vld [vmem:[%s0 + $0x18] sm:$0xff]
  %v33 = vld [vmem:[%s0 + $0x20] sm:$0xff]
  %v34 = vld [vmem:[%s0 + $0x28] sm:$0xff]
  %v35 = vld [vmem:[%s0 + $0x30] sm:$0xff]
  %v36 = vld [vmem:[%s0 + $0x38] sm:$0xff]
  %v37 = vld [vmem:[%s0 + $0x40] sm:$0xff]
  %v38 = vld [vmem:[%s0 + $0x48] sm:$0xff]
  %v39 = vld [vmem:[%s0 + $0x50] sm:$0xff]
  %v40 = vld [vmem:[%s0 + $0x58] sm:$0xff]
  %v41 = vld [vmem:[%s0 + $0x60] sm:$0xff]
  %v42 = vld [vmem:[%s0 + $0x68] sm:$0xff]
  %v43 = vld [vmem:[%s0 + $0x70] sm:$0xff]
  %v44 = vld [vmem:[%s0 + $0x78] sm:$0xff]
  %v45 = vld [vmem:[%s2] sm:$0x1]
  %v46 = vld [vmem:[%s3] sm:$0x1]
  %vm47 = vcmask 64512
  %v48 = vsel %vm47, %v29, 0.0
  %v49 = vsel %vm47, %v30, 0.0
  %v50 = vadd.f32 %v48, %v49
  %v51 = vsel %vm47, %v31, 0.0
  %v52 = vadd.f32 %v50, %v51
  %v53 = vsel %vm47, %v32, 0.0
  %v54 = vadd.f32 %v52, %v53
  %v55 = vsel %vm47, %v33, 0.0
  %v56 = vadd.f32 %v54, %v55
  %v57 = vsel %vm47, %v34, 0.0
  %v58 = vadd.f32 %v56, %v57
  %v59 = vsel %vm47, %v35, 0.0
  %v60 = vadd.f32 %v58, %v59
  %v61 = vsel %vm47, %v36, 0.0
  %v62 = vadd.f32 %v60, %v61
  %v63 = vsel %vm47, %v37, 0.0
  %v64 = vadd.f32 %v62, %v63
  %v65 = vsel %vm47, %v38, 0.0
  %v66 = vadd.f32 %v64, %v65
  %v67 = vsel %vm47, %v39, 0.0
  %v68 = vadd.f32 %v66, %v67
  %v69 = vsel %vm47, %v40, 0.0
  %v70 = vadd.f32 %v68, %v69
  %v71 = vsel %vm47, %v41, 0.0
  %v72 = vadd.f32 %v70, %v71
  %v73 = vsel %vm47, %v42, 0.0
  %v74 = vadd.f32 %v72, %v73
  %v75 = vsel %vm47, %v43, 0.0
  %v76 = vadd.f32 %v74, %v75
  %v77 = vsel %vm47, %v44, 0.0
  %v78 = vadd.f32 %v76, %v77
  %v79 = vrot.slane %v78, 4
  %v80 = vadd.f32 %v78, %v79
  %v81 = vrot.slane %v80, 2
  %v82 = vadd.f32 %v80, %v81
  %v83 = vrot.slane %v82, 1
  %v84 = vadd.f32 %v82, %v83
  %v85 = vrcp.pop 128.0
  %v86 = vmul.f32 128.0, %v85
  %v87 = vsub.f32 1.0, %v86
  %v88 = vmul.f32 %v85, %v87
  %v89 = vadd.f32 %v85, %v88
  %vm90 = vweird.f32 %v85
  %v91 = vsel %vm90, %v85, %v89
  %v92 = vmul.f32 %v84, %v91
  %v93 = vsub.f32 %v29, %v92
  %v94 = vsub.f32 %v30, %v92
  %v95 = vsub.f32 %v31, %v92
  %v96 = vsub.f32 %v32, %v92
  %v97 = vsub.f32 %v33, %v92
  %v98 = vsub.f32 %v34, %v92
  %v99 = vsub.f32 %v35, %v92
  %v100 = vsub.f32 %v36, %v92
  %v101 = vsub.f32 %v37, %v92
  %v102 = vsub.f32 %v38, %v92
  %v103 = vsub.f32 %v39, %v92
  %v104 = vsub.f32 %v40, %v92
  %v105 = vsub.f32 %v41, %v92
  %v106 = vsub.f32 %v42, %v92
  %v107 = vsub.f32 %v43, %v92
  %v108 = vsub.f32 %v44, %v92
  %v109 = vmul.f32 %v93, %v93
  %v110 = vmul.f32 %v94, %v94
  %v111 = vmul.f32 %v95, %v95
  %v112 = vmul.f32 %v96, %v96
  %v113 = vmul.f32 %v97, %v97
  %v114 = vmul.f32 %v98, %v98
  %v115 = vmul.f32 %v99, %v99
  %v116 = vmul.f32 %v100, %v100
  %v117 = vmul.f32 %v101, %v101
  %v118 = vmul.f32 %v102, %v102
  %v119 = vmul.f32 %v103, %v103
  %v120 = vmul.f32 %v104, %v104
  %v121 = vmul.f32 %v105, %v105
  %v122 = vmul.f32 %v106, %v106
  %v123 = vmul.f32 %v107, %v107
  %v124 = vmul.f32 %v108, %v108
  %v125 = vsel %vm47, %v109, 0.0
  %v126 = vsel %vm47, %v110, 0.0
  %v127 = vadd.f32 %v125, %v126
  %v128 = vsel %vm47, %v111, 0.0
  %v129 = vadd.f32 %v127, %v128
  %v130 = vsel %vm47, %v112, 0.0
  %v131 = vadd.f32 %v129, %v130
  %v132 = vsel %vm47, %v113, 0.0
  %v133 = vadd.f32 %v131, %v132
  %v134 = vsel %vm47, %v114, 0.0
  %v135 = vadd.f32 %v133, %v134
  %v136 = vsel %vm47, %v115, 0.0
  %v137 = vadd.f32 %v135, %v136
  %v138 = vsel %vm47, %v116, 0.0
  %v139 = vadd.f32 %v137, %v138
  %v140 = vsel %vm47, %v117, 0.0
  %v141 = vadd.f32 %v139, %v140
  %v142 = vsel %vm47, %v118, 0.0
  %v143 = vadd.f32 %v141, %v142
  %v144 = vsel %vm47, %v119, 0.0
  %v145 = vadd.f32 %v143, %v144
  %v146 = vsel %vm47, %v120, 0.0
  %v147 = vadd.f32 %v145, %v146
  %v148 = vsel %vm47, %v121, 0.0
  %v149 = vadd.f32 %v147, %v148
  %v150 = vsel %vm47, %v122, 0.0
  %v151 = vadd.f32 %v149, %v150
  %v152 = vsel %vm47, %v123, 0.0
  %v153 = vadd.f32 %v151, %v152
  %v154 = vsel %vm47, %v124, 0.0
  %v155 = vadd.f32 %v153, %v154
  %v156 = vrot.slane %v155, 4
  %v157 = vadd.f32 %v155, %v156
  %v158 = vrot.slane %v157, 2
  %v159 = vadd.f32 %v157, %v158
  %v160 = vrot.slane %v159, 1
  %v161 = vadd.f32 %v159, %v160
  %v162 = vmul.f32 %v161, %v91
  %v163 = vadd.f32 %v162, 1e-05
  %v164 = vrsqrt.pop %v163
  %v165 = vmul.f32 %v164, %v163
  %v166 = vmul.f32 %v165, %v164
  %v167 = vmul.f32 0.5, %v166
  %v168 = vsub.f32 1.5, %v167
  %v169 = vmul.f32 %v164, %v168
  %vm170 = vweird.f32 %v163
  %vm171 = vweird.f32 %v164
  %vm172 = vmor %vm170, %vm171
  %v173 = vsel %vm172, %v164, %v169
  %v174 = vmul.f32 %v93, %v173
  %v175 = vmul.f32 %v94, %v173
  %v176 = vmul.f32 %v95, %v173
  %v177 = vmul.f32 %v96, %v173
  %v178 = vmul.f32 %v97, %v173
  %v179 = vmul.f32 %v98, %v173
  %v180 = vmul.f32 %v99, %v173
  %v181 = vmul.f32 %v100, %v173
  %v182 = vmul.f32 %v101, %v173
  %v183 = vmul.f32 %v102, %v173
  %v184 = vmul.f32 %v103, %v173
  %v185 = vmul.f32 %v104, %v173
  %v186 = vmul.f32 %v105, %v173
  %v187 = vmul.f32 %v106, %v173
  %v188 = vmul.f32 %v107, %v173
  %v189 = vmul.f32 %v108, %v173
  %v191 = vperm.slane %v45, 0
  %v193 = vmul.f32 %v174, %v191
  %v194 = vmul.f32 %v175, %v191
  %v195 = vmul.f32 %v176, %v191
  %v196 = vmul.f32 %v177, %v191
  %v197 = vmul.f32 %v178, %v191
  %v198 = vmul.f32 %v179, %v191
  %v199 = vmul.f32 %v180, %v191
  %v200 = vmul.f32 %v181, %v191
  %v201 = vmul.f32 %v182, %v191
  %v202 = vmul.f32 %v183, %v191
  %v203 = vmul.f32 %v184, %v191
  %v204 = vmul.f32 %v185, %v191
  %v205 = vmul.f32 %v186, %v191
  %v206 = vmul.f32 %v187, %v191
  %v207 = vmul.f32 %v188, %v191
  %v208 = vmul.f32 %v189, %v191
  %v210 = vperm.slane %v46, 0
  %v212 = vadd.f32 %v193, %v210
  %v213 = vadd.f32 %v194, %v210
  %v214 = vadd.f32 %v195, %v210
  %v215 = vadd.f32 %v196, %v210
  %v216 = vadd.f32 %v197, %v210
  %v217 = vadd.f32 %v198, %v210
  %v218 = vadd.f32 %v199, %v210
  %v219 = vadd.f32 %v200, %v210
  %v220 = vadd.f32 %v201, %v210
  %v221 = vadd.f32 %v202, %v210
  %v222 = vadd.f32 %v203, %v210
  %v223 = vadd.f32 %v204, %v210
  %v224 = vadd.f32 %v205, %v210
  %v225 = vadd.f32 %v206, %v210
  %v226 = vadd.f32 %v207, %v210
  %v227 = vadd.f32 %v208, %v210
  %v228 = vmax.f32 %v212, 0.0
  %v229 = vmax.f32 %v213, 0.0
  %v230 = vmax.f32 %v214, 0.0
  %v231 = vmax.f32 %v215, 0.0
  %v232 = vmax.f32 %v216, 0.0
  %v233 = vmax.f32 %v217, 0.0
  %v234 = vmax.f32 %v218, 0.0
  %v235 = vmax.f32 %v219, 0.0
  %v236 = vmax.f32 %v220, 0.0
  %v237 = vmax.f32 %v221, 0.0
  %v238 = vmax.f32 %v222, 0.0
  %v239 = vmax.f32 %v223, 0.0
  %v240 = vmax.f32 %v224, 0.0
  %v241 = vmax.f32 %v225, 0.0
  %v242 = vmax.f32 %v226, 0.0
  %v243 = vmax.f32 %v227, 0.0
  %244 = vst.msk [vmem:[#allocation2] sm:$0xff] %vm47, 0.0
  %vm245 = vcmask 58368
  %246 = vst.msk [vmem:[#allocation2 + $0x8] sm:$0x3] %vm245, 0.0
  %247 = vst.msk [vmem:[#allocation2 + $0x10] sm:$0xff] %vm47, 0.0
  %248 = vst.msk [vmem:[#allocation2 + $0x18] sm:$0x3] %vm245, 0.0
  %249 = vst.msk [vmem:[#allocation2 + $0x20] sm:$0xff] %vm47, 0.0
  %250 = vst.msk [vmem:[#allocation2 + $0x28] sm:$0x3] %vm245, 0.0
  %251 = vst.msk [vmem:[#allocation2 + $0x30] sm:$0xff] %vm47, 0.0
  %252 = vst.msk [vmem:[#allocation2 + $0x38] sm:$0x3] %vm245, 0.0
  %253 = vst.msk [vmem:[#allocation2 + $0x40] sm:$0xff] %vm47, 0.0
  %254 = vst.msk [vmem:[#allocation2 + $0x48] sm:$0x3] %vm245, 0.0
  %255 = vst.msk [vmem:[#allocation2 + $0x50] sm:$0xff] %vm47, 0.0
  %256 = vst.msk [vmem:[#allocation2 + $0x58] sm:$0x3] %vm245, 0.0
  %257 = vst.msk [vmem:[#allocation2 + $0x60] sm:$0xff] %vm47, 0.0
  %258 = vst.msk [vmem:[#allocation2 + $0x68] sm:$0x3] %vm245, 0.0
  %259 = vst.msk [vmem:[#allocation2 + $0x70] sm:$0xff] %vm47, 0.0
  %260 = vst.msk [vmem:[#allocation2 + $0x78] sm:$0x3] %vm245, 0.0
  %261 = vst.msk [vmem:[#allocation2 + $0x80] sm:$0xff] %vm47, 0.0
  %262 = vst.msk [vmem:[#allocation2 + $0x88] sm:$0x3] %vm245, 0.0
  %263 = vst.msk [vmem:[#allocation2 + $0x90] sm:$0xff] %vm47, 0.0
  %264 = vst.msk [vmem:[#allocation2 + $0x98] sm:$0x3] %vm245, 0.0
  %265 = vst.msk [vmem:[#allocation2 + $0xa0] sm:$0xff] %vm47, 0.0
  %266 = vst.msk [vmem:[#allocation2 + $0xa8] sm:$0x3] %vm245, 0.0
  %267 = vst.msk [vmem:[#allocation2 + $0xb0] sm:$0xff] %vm47, 0.0
  %268 = vst.msk [vmem:[#allocation2 + $0xb8] sm:$0x3] %vm245, 0.0
  %269 = vst.msk [vmem:[#allocation2 + $0xc0] sm:$0xff] %vm47, 0.0
  %270 = vst.msk [vmem:[#allocation2 + $0xc8] sm:$0x3] %vm245, 0.0
  %271 = vst.msk [vmem:[#allocation2 + $0xd0] sm:$0xff] %vm47, 0.0
  %272 = vst.msk [vmem:[#allocation2 + $0xd8] sm:$0x3] %vm245, 0.0
  %273 = vst.msk [vmem:[#allocation2 + $0xe0] sm:$0xff] %vm47, 0.0
  %274 = vst.msk [vmem:[#allocation2 + $0xe8] sm:$0x3] %vm245, 0.0
  %275 = vst.msk [vmem:[#allocation2 + $0xf0] sm:$0xff] %vm47, 0.0
  %276 = vst.msk [vmem:[#allocation2 + $0xf8] sm:$0x3] %vm245, 0.0
  %277 = vst.msk [vmem:[#allocation2 + $0x100] sm:$0xff] %vm47, 0.0
  %278 = vst.msk [vmem:[#allocation2 + $0x108] sm:$0x3] %vm245, 0.0
  %279 = vst.msk [vmem:[#allocation2 + $0x110] sm:$0xff] %vm47, 0.0
  %280 = vst.msk [vmem:[#allocation2 + $0x118] sm:$0x3] %vm245, 0.0
  %281 = vst.msk [vmem:[#allocation2 + $0x120] sm:$0xff] %vm47, 0.0
  %282 = vst.msk [vmem:[#allocation2 + $0x128] sm:$0x3] %vm245, 0.0
  %283 = vst.msk [vmem:[#allocation2 + $0x130] sm:$0xff] %vm47, 0.0
  %284 = vst.msk [vmem:[#allocation2 + $0x138] sm:$0x3] %vm245, 0.0
  %s285 = scalar_lea.vmem [#allocation2], 16
  %286 = vst.msk [vmem:[%s285 + $0x1] sm:$0xff] %vm47, %v228
  %287 = vst.msk [vmem:[%s285 + $0x11] sm:$0xff] %vm47, %v229
  %288 = vst.msk [vmem:[%s285 + $0x21] sm:$0xff] %vm47, %v230
  %289 = vst.msk [vmem:[%s285 + $0x31] sm:$0xff] %vm47, %v231
  %290 = vst.msk [vmem:[%s285 + $0x41] sm:$0xff] %vm47, %v232
  %291 = vst.msk [vmem:[%s285 + $0x51] sm:$0xff] %vm47, %v233
  %292 = vst.msk [vmem:[%s285 + $0x61] sm:$0xff] %vm47, %v234
  %293 = vst.msk [vmem:[%s285 + $0x71] sm:$0xff] %vm47, %v235
  %294 = vst.msk [vmem:[%s285 + $0xa1] sm:$0xff] %vm47, %v236
  %295 = vst.msk [vmem:[%s285 + $0xb1] sm:$0xff] %vm47, %v237
  %296 = vst.msk [vmem:[%s285 + $0xc1] sm:$0xff] %vm47, %v238
  %297 = vst.msk [vmem:[%s285 + $0xd1] sm:$0xff] %vm47, %v239
  %298 = vst.msk [vmem:[%s285 + $0xe1] sm:$0xff] %vm47, %v240
  %299 = vst.msk [vmem:[%s285 + $0xf1] sm:$0xff] %vm47, %v241
  %300 = vst.msk [vmem:[%s285 + $0x101] sm:$0xff] %vm47, %v242
  %301 = vst.msk [vmem:[%s285 + $0x111] sm:$0xff] %vm47, %v243
  %v302 = vld [vmem:[#allocation2] sm:$0xff]
  %v303 = vld [vmem:[#allocation2 + $0x10] sm:$0xff]
  %v304 = vld [vmem:[#allocation2 + $0x20] sm:$0xff]
  %v305 = vld [vmem:[#allocation2 + $0x30] sm:$0xff]
  %v306 = vld [vmem:[#allocation2 + $0x40] sm:$0xff]
  %v307 = vld [vmem:[#allocation2 + $0x50] sm:$0xff]
  %v308 = vld [vmem:[#allocation2 + $0x60] sm:$0xff]
  %v309 = vld [vmem:[#allocation2 + $0x70] sm:$0xff]
  %v310 = vld [vmem:[#allocation2 + $0xa0] sm:$0xff]
  %v311 = vld [vmem:[#allocation2 + $0xb0] sm:$0xff]
  %v312 = vld [vmem:[#allocation2 + $0xc0] sm:$0xff]
  %v313 = vld [vmem:[#allocation2 + $0xd0] sm:$0xff]
  %v314 = vld [vmem:[#allocation2 + $0xe0] sm:$0xff]
  %v315 = vld [vmem:[#allocation2 + $0xf0] sm:$0xff]
  %v316 = vld [vmem:[#allocation2 + $0x100] sm:$0xff]
  %v317 = vld [vmem:[#allocation2 + $0x110] sm:$0xff]
  %v318 = vld [vmem:[#allocation2 + $0x1] sm:$0xff]
  %v319 = vld [vmem:[#allocation2 + $0x11] sm:$0xff]
  %v320 = vld [vmem:[#allocation2 + $0x21] sm:$0xff]
  %v321 = vld [vmem:[#allocation2 + $0x31] sm:$0xff]
  %v322 = vld [vmem:[#allocation2 + $0x41] sm:$0xff]
  %v323 = vld [vmem:[#allocation2 + $0x51] sm:$0xff]
  %v324 = vld [vmem:[#allocation2 + $0x61] sm:$0xff]
  %v325 = vld [vmem:[#allocation2 + $0x71] sm:$0xff]
  %v326 = vld [vmem:[#allocation2 + $0xa1] sm:$0xff]
  %v327 = vld [vmem:[#allocation2 + $0xb1] sm:$0xff]
  %v328 = vld [vmem:[#allocation2 + $0xc1] sm:$0xff]
  %v329 = vld [vmem:[#allocation2 + $0xd1] sm:$0xff]
  %v330 = vld [vmem:[#allocation2 + $0xe1] sm:$0xff]
  %v331 = vld [vmem:[#allocation2 + $0xf1] sm:$0xff]
  %v332 = vld [vmem:[#allocation2 + $0x101] sm:$0xff]
  %v333 = vld [vmem:[#allocation2 + $0x111] sm:$0xff]
  %v334 = vld [vmem:[#allocation2 + $0x2] sm:$0xff]
  %v335 = vld [vmem:[#allocation2 + $0x12] sm:$0xff]
  %v336 = vld [vmem:[#allocation2 + $0x22] sm:$0xff]
  %v337 = vld [vmem:[#allocation2 + $0x32] sm:$0xff]
  %v338 = vld [vmem:[#allocation2 + $0x42] sm:$0xff]
  %v339 = vld [vmem:[#allocation2 + $0x52] sm:$0xff]
  %v340 = vld [vmem:[#allocation2 + $0x62] sm:$0xff]
  %v341 = vld [vmem:[#allocation2 + $0x72] sm:$0xff]
  %v342 = vld [vmem:[#allocation2 + $0xa2] sm:$0xff]
  %v343 = vld [vmem:[#allocation2 + $0xb2] sm:$0xff]
  %v344 = vld [vmem:[#allocation2 + $0xc2] sm:$0xff]
  %v345 = vld [vmem:[#allocation2 + $0xd2] sm:$0xff]
  %v346 = vld [vmem:[#allocation2 + $0xe2] sm:$0xff]
  %v347 = vld [vmem:[#allocation2 + $0xf2] sm:$0xff]
  %v348 = vld [vmem:[#allocation2 + $0x102] sm:$0xff]
  %v349 = vld [vmem:[#allocation2 + $0x112] sm:$0xff]
  %v350 = vld [vmem:[%s285] sm:$0xff]
  %v351 = vld [vmem:[%s285 + $0x10] sm:$0xff]
  %v352 = vld [vmem:[%s285 + $0x20] sm:$0xff]
  %v353 = vld [vmem:[%s285 + $0x30] sm:$0xff]
  %v354 = vld [vmem:[%s285 + $0x40] sm:$0xff]
  %v355 = vld [vmem:[%s285 + $0x50] sm:$0xff]
  %v356 = vld [vmem:[%s285 + $0x60] sm:$0xff]
  %v357 = vld [vmem:[%s285 + $0x70] sm:$0xff]
  %v358 = vld [vmem:[%s285 + $0xa0] sm:$0xff]
  %v359 = vld [vmem:[%s285 + $0xb0] sm:$0xff]
  %v360 = vld [vmem:[%s285 + $0xc0] sm:$0xff]
  %v361 = vld [vmem:[%s285 + $0xd0] sm:$0xff]
  %v362 = vld [vmem:[%s285 + $0xe0] sm:$0xff]
  %v363 = vld [vmem:[%s285 + $0xf0] sm:$0xff]
  %v364 = vld [vmem:[%s285 + $0x100] sm:$0xff]
  %v365 = vld [vmem:[%s285 + $0x110] sm:$0xff]
  %v366 = vld [vmem:[%s285 + $0x1] sm:$0xff]
  %v367 = vld [vmem:[%s285 + $0x11] sm:$0xff]
  %v368 = vld [vmem:[%s285 + $0x21] sm:$0xff]
  %v369 = vld [vmem:[%s285 + $0x31] sm:$0xff]
  %v370 = vld [vmem:[%s285 + $0x41] sm:$0xff]
  %v371 = vld [vmem:[%s285 + $0x51] sm:$0xff]
  %v372 = vld [vmem:[%s285 + $0x61] sm:$0xff]
  %v373 = vld [vmem:[%s285 + $0x71] sm:$0xff]
  %v374 = vld [vmem:[%s285 + $0xa1] sm:$0xff]
  %v375 = vld [vmem:[%s285 + $0xb1] sm:$0xff]
  %v376 = vld [vmem:[%s285 + $0xc1] sm:$0xff]
  %v377 = vld [vmem:[%s285 + $0xd1] sm:$0xff]
  %v378 = vld [vmem:[%s285 + $0xe1] sm:$0xff]
  %v379 = vld [vmem:[%s285 + $0xf1] sm:$0xff]
  %v380 = vld [vmem:[%s285 + $0x101] sm:$0xff]
  %v381 = vld [vmem:[%s285 + $0x111] sm:$0xff]
  %v382 = vld [vmem:[%s285 + $0x2] sm:$0xff]
  %v383 = vld [vmem:[%s285 + $0x12] sm:$0xff]
  %v384 = vld [vmem:[%s285 + $0x22] sm:$0xff]
  %v385 = vld [vmem:[%s285 + $0x32] sm:$0xff]
  %v386 = vld [vmem:[%s285 + $0x42] sm:$0xff]
  %v387 = vld [vmem:[%s285 + $0x52] sm:$0xff]
  %v388 = vld [vmem:[%s285 + $0x62] sm:$0xff]
  %v389 = vld [vmem:[%s285 + $0x72] sm:$0xff]
  %v390 = vld [vmem:[%s285 + $0xa2] sm:$0xff]
  %v391 = vld [vmem:[%s285 + $0xb2] sm:$0xff]
  %v392 = vld [vmem:[%s285 + $0xc2] sm:$0xff]
  %v393 = vld [vmem:[%s285 + $0xd2] sm:$0xff]
  %v394 = vld [vmem:[%s285 + $0xe2] sm:$0xff]
  %v395 = vld [vmem:[%s285 + $0xf2] sm:$0xff]
  %v396 = vld [vmem:[%s285 + $0x102] sm:$0xff]
  %v397 = vld [vmem:[%s285 + $0x112] sm:$0xff]
  %s398 = scalar_lea.vmem [#allocation2], 32
  %v399 = vld [vmem:[%s398] sm:$0xff]
  %v400 = vld [vmem:[%s398 + $0x10] sm:$0xff]
  %v401 = vld [vmem:[%s398 + $0x20] sm:$0xff]
  %v402 = vld [vmem:[%s398 + $0x30] sm:$0xff]
  %v403 = vld [vmem:[%s398 + $0x40] sm:$0xff]
  %v404 = vld [vmem:[%s398 + $0x50] sm:$0xff]
  %v405 = vld [vmem:[%s398 + $0x60] sm:$0xff]
  %v406 = vld [vmem:[%s398 + $0x70] sm:$0xff]
  %v407 = vld [vmem:[%s398 + $0xa0] sm:$0xff]
  %v408 = vld [vmem:[%s398 + $0xb0] sm:$0xff]
  %v409 = vld [vmem:[%s398 + $0xc0] sm:$0xff]
  %v410 = vld [vmem:[%s398 + $0xd0] sm:$0xff]
  %v411 = vld [vmem:[%s398 + $0xe0] sm:$0xff]
  %v412 = vld [vmem:[%s398 + $0xf0] sm:$0xff]
  %v413 = vld [vmem:[%s398 + $0x100] sm:$0xff]
  %v414 = vld [vmem:[%s398 + $0x110] sm:$0xff]
  %v415 = vld [vmem:[%s398 + $0x1] sm:$0xff]
  %v416 = vld [vmem:[%s398 + $0x11] sm:$0xff]
  %v417 = vld [vmem:[%s398 + $0x21] sm:$0xff]
  %v418 = vld [vmem:[%s398 + $0x31] sm:$0xff]
  %v419 = vld [vmem:[%s398 + $0x41] sm:$0xff]
  %v420 = vld [vmem:[%s398 + $0x51] sm:$0xff]
  %v421 = vld [vmem:[%s398 + $0x61] sm:$0xff]
  %v422 = vld [vmem:[%s398 + $0x71] sm:$0xff]
  %v423 = vld [vmem:[%s398 + $0xa1] sm:$0xff]
  %v424 = vld [vmem:[%s398 + $0xb1] sm:$0xff]
  %v425 = vld [vmem:[%s398 + $0xc1] sm:$0xff]
  %v426 = vld [vmem:[%s398 + $0xd1] sm:$0xff]
  %v427 = vld [vmem:[%s398 + $0xe1] sm:$0xff]
  %v428 = vld [vmem:[%s398 + $0xf1] sm:$0xff]
  %v429 = vld [vmem:[%s398 + $0x101] sm:$0xff]
  %v430 = vld [vmem:[%s398 + $0x111] sm:$0xff]
  %v431 = vld [vmem:[%s398 + $0x2] sm:$0xff]
  %v432 = vld [vmem:[%s398 + $0x12] sm:$0xff]
  %v433 = vld [vmem:[%s398 + $0x22] sm:$0xff]
  %v434 = vld [vmem:[%s398 + $0x32] sm:$0xff]
  %v435 = vld [vmem:[%s398 + $0x42] sm:$0xff]
  %v436 = vld [vmem:[%s398 + $0x52] sm:$0xff]
  %v437 = vld [vmem:[%s398 + $0x62] sm:$0xff]
  %v438 = vld [vmem:[%s398 + $0x72] sm:$0xff]
  %v439 = vld [vmem:[%s398 + $0xa2] sm:$0xff]
  %v440 = vld [vmem:[%s398 + $0xb2] sm:$0xff]
  %v441 = vld [vmem:[%s398 + $0xc2] sm:$0xff]
  %v442 = vld [vmem:[%s398 + $0xd2] sm:$0xff]
  %v443 = vld [vmem:[%s398 + $0xe2] sm:$0xff]
  %v444 = vld [vmem:[%s398 + $0xf2] sm:$0xff]
  %v445 = vld [vmem:[%s398 + $0x102] sm:$0xff]
  %v446 = vld [vmem:[%s398 + $0x112] sm:$0xff]
  %463 = vrot.lane.b32.xlu0 %v318, 8
  %v464 = vpop.permute.xlu0 %463
  %465 = vrot.lane.b32.xlu0 %v319, 8
  %v466 = vpop.permute.xlu0 %465
  %467 = vrot.lane.b32.xlu0 %v320, 8
  %v468 = vpop.permute.xlu0 %467
  %469 = vrot.lane.b32.xlu0 %v321, 8
  %v470 = vpop.permute.xlu0 %469
  %471 = vrot.lane.b32.xlu0 %v322, 8
  %v472 = vpop.permute.xlu0 %471
  %473 = vrot.lane.b32.xlu0 %v323, 8
  %v474 = vpop.permute.xlu0 %473
  %475 = vrot.lane.b32.xlu0 %v324, 8
  %v476 = vpop.permute.xlu0 %475
  %477 = vrot.lane.b32.xlu0 %v325, 8
  %v478 = vpop.permute.xlu0 %477
  %479 = vrot.lane.b32.xlu0 %v326, 8
  %v480 = vpop.permute.xlu0 %479
  %481 = vrot.lane.b32.xlu0 %v327, 8
  %v482 = vpop.permute.xlu0 %481
  %483 = vrot.lane.b32.xlu0 %v328, 8
  %v484 = vpop.permute.xlu0 %483
  %485 = vrot.lane.b32.xlu0 %v329, 8
  %v486 = vpop.permute.xlu0 %485
  %487 = vrot.lane.b32.xlu0 %v330, 8
  %v488 = vpop.permute.xlu0 %487
  %489 = vrot.lane.b32.xlu0 %v331, 8
  %v490 = vpop.permute.xlu0 %489
  %491 = vrot.lane.b32.xlu0 %v332, 8
  %v492 = vpop.permute.xlu0 %491
  %493 = vrot.lane.b32.xlu0 %v333, 8
  %v494 = vpop.permute.xlu0 %493
  %527 = vrot.lane.b32.xlu0 %v334, 16
  %v528 = vpop.permute.xlu0 %527
  %529 = vrot.lane.b32.xlu0 %v335, 16
  %v530 = vpop.permute.xlu0 %529
  %531 = vrot.lane.b32.xlu0 %v336, 16
  %v532 = vpop.permute.xlu0 %531
  %533 = vrot.lane.b32.xlu0 %v337, 16
  %v534 = vpop.permute.xlu0 %533
  %535 = vrot.lane.b32.xlu0 %v338, 16
  %v536 = vpop.permute.xlu0 %535
  %537 = vrot.lane.b32.xlu0 %v339, 16
  %v538 = vpop.permute.xlu0 %537
  %539 = vrot.lane.b32.xlu0 %v340, 16
  %v540 = vpop.permute.xlu0 %539
  %541 = vrot.lane.b32.xlu0 %v341, 16
  %v542 = vpop.permute.xlu0 %541
  %543 = vrot.lane.b32.xlu0 %v342, 16
  %v544 = vpop.permute.xlu0 %543
  %545 = vrot.lane.b32.xlu0 %v343, 16
  %v546 = vpop.permute.xlu0 %545
  %547 = vrot.lane.b32.xlu0 %v344, 16
  %v548 = vpop.permute.xlu0 %547
  %549 = vrot.lane.b32.xlu0 %v345, 16
  %v550 = vpop.permute.xlu0 %549
  %551 = vrot.lane.b32.xlu0 %v346, 16
  %v552 = vpop.permute.xlu0 %551
  %553 = vrot.lane.b32.xlu0 %v347, 16
  %v554 = vpop.permute.xlu0 %553
  %555 = vrot.lane.b32.xlu0 %v348, 16
  %v556 = vpop.permute.xlu0 %555
  %557 = vrot.lane.b32.xlu0 %v349, 16
  %v558 = vpop.permute.xlu0 %557
  %591 = vrot.lane.b32.xlu0 %v350, 24
  %v592 = vpop.permute.xlu0 %591
  %593 = vrot.lane.b32.xlu0 %v351, 24
  %v594 = vpop.permute.xlu0 %593
  %595 = vrot.lane.b32.xlu0 %v352, 24
  %v596 = vpop.permute.xlu0 %595
  %597 = vrot.lane.b32.xlu0 %v353, 24
  %v598 = vpop.permute.xlu0 %597
  %599 = vrot.lane.b32.xlu0 %v354, 24
  %v600 = vpop.permute.xlu0 %599
  %601 = vrot.lane.b32.xlu0 %v355, 24
  %v602 = vpop.permute.xlu0 %601
  %603 = vrot.lane.b32.xlu0 %v356, 24
  %v604 = vpop.permute.xlu0 %603
  %605 = vrot.lane.b32.xlu0 %v357, 24
  %v606 = vpop.permute.xlu0 %605
  %607 = vrot.lane.b32.xlu0 %v358, 24
  %v608 = vpop.permute.xlu0 %607
  %609 = vrot.lane.b32.xlu0 %v359, 24
  %v610 = vpop.permute.xlu0 %609
  %611 = vrot.lane.b32.xlu0 %v360, 24
  %v612 = vpop.permute.xlu0 %611
  %613 = vrot.lane.b32.xlu0 %v361, 24
  %v614 = vpop.permute.xlu0 %613
  %615 = vrot.lane.b32.xlu0 %v362, 24
  %v616 = vpop.permute.xlu0 %615
  %617 = vrot.lane.b32.xlu0 %v363, 24
  %v618 = vpop.permute.xlu0 %617
  %619 = vrot.lane.b32.xlu0 %v364, 24
  %v620 = vpop.permute.xlu0 %619
  %621 = vrot.lane.b32.xlu0 %v365, 24
  %v622 = vpop.permute.xlu0 %621
  %655 = vrot.lane.b32.xlu0 %v366, 32
  %v656 = vpop.permute.xlu0 %655
  %657 = vrot.lane.b32.xlu0 %v367, 32
  %v658 = vpop.permute.xlu0 %657
  %659 = vrot.lane.b32.xlu0 %v368, 32
  %v660 = vpop.permute.xlu0 %659
  %661 = vrot.lane.b32.xlu0 %v369, 32
  %v662 = vpop.permute.xlu0 %661
  %663 = vrot.lane.b32.xlu0 %v370, 32
  %v664 = vpop.permute.xlu0 %663
  %665 = vrot.lane.b32.xlu0 %v371, 32
  %v666 = vpop.permute.xlu0 %665
  %667 = vrot.lane.b32.xlu0 %v372, 32
  %v668 = vpop.permute.xlu0 %667
  %669 = vrot.lane.b32.xlu0 %v373, 32
  %v670 = vpop.permute.xlu0 %669
  %671 = vrot.lane.b32.xlu0 %v374, 32
  %v672 = vpop.permute.xlu0 %671
  %673 = vrot.lane.b32.xlu0 %v375, 32
  %v674 = vpop.permute.xlu0 %673
  %675 = vrot.lane.b32.xlu0 %v376, 32
  %v676 = vpop.permute.xlu0 %675
  %677 = vrot.lane.b32.xlu0 %v377, 32
  %v678 = vpop.permute.xlu0 %677
  %679 = vrot.lane.b32.xlu0 %v378, 32
  %v680 = vpop.permute.xlu0 %679
  %681 = vrot.lane.b32.xlu0 %v379, 32
  %v682 = vpop.permute.xlu0 %681
  %683 = vrot.lane.b32.xlu0 %v380, 32
  %v684 = vpop.permute.xlu0 %683
  %685 = vrot.lane.b32.xlu0 %v381, 32
  %v686 = vpop.permute.xlu0 %685
  %719 = vrot.lane.b32.xlu0 %v382, 40
  %v720 = vpop.permute.xlu0 %719
  %721 = vrot.lane.b32.xlu0 %v383, 40
  %v722 = vpop.permute.xlu0 %721
  %723 = vrot.lane.b32.xlu0 %v384, 40
  %v724 = vpop.permute.xlu0 %723
  %725 = vrot.lane.b32.xlu0 %v385, 40
  %v726 = vpop.permute.xlu0 %725
  %727 = vrot.lane.b32.xlu0 %v386, 40
  %v728 = vpop.permute.xlu0 %727
  %729 = vrot.lane.b32.xlu0 %v387, 40
  %v730 = vpop.permute.xlu0 %729
  %731 = vrot.lane.b32.xlu0 %v388, 40
  %v732 = vpop.permute.xlu0 %731
  %733 = vrot.lane.b32.xlu0 %v389, 40
  %v734 = vpop.permute.xlu0 %733
  %735 = vrot.lane.b32.xlu0 %v390, 40
  %v736 = vpop.permute.xlu0 %735
  %737 = vrot.lane.b32.xlu0 %v391, 40
  %v738 = vpop.permute.xlu0 %737
  %739 = vrot.lane.b32.xlu0 %v392, 40
  %v740 = vpop.permute.xlu0 %739
  %741 = vrot.lane.b32.xlu0 %v393, 40
  %v742 = vpop.permute.xlu0 %741
  %743 = vrot.lane.b32.xlu0 %v394, 40
  %v744 = vpop.permute.xlu0 %743
  %745 = vrot.lane.b32.xlu0 %v395, 40
  %v746 = vpop.permute.xlu0 %745
  %747 = vrot.lane.b32.xlu0 %v396, 40
  %v748 = vpop.permute.xlu0 %747
  %749 = vrot.lane.b32.xlu0 %v397, 40
  %v750 = vpop.permute.xlu0 %749
  %783 = vrot.lane.b32.xlu0 %v399, 48
  %v784 = vpop.permute.xlu0 %783
  %785 = vrot.lane.b32.xlu0 %v400, 48
  %v786 = vpop.permute.xlu0 %785
  %787 = vrot.lane.b32.xlu0 %v401, 48
  %v788 = vpop.permute.xlu0 %787
  %789 = vrot.lane.b32.xlu0 %v402, 48
  %v790 = vpop.permute.xlu0 %789
  %791 = vrot.lane.b32.xlu0 %v403, 48
  %v792 = vpop.permute.xlu0 %791
  %793 = vrot.lane.b32.xlu0 %v404, 48
  %v794 = vpop.permute.xlu0 %793
  %795 = vrot.lane.b32.xlu0 %v405, 48
  %v796 = vpop.permute.xlu0 %795
  %797 = vrot.lane.b32.xlu0 %v406, 48
  %v798 = vpop.permute.xlu0 %797
  %799 = vrot.lane.b32.xlu0 %v407, 48
  %v800 = vpop.permute.xlu0 %799
  %801 = vrot.lane.b32.xlu0 %v408, 48
  %v802 = vpop.permute.xlu0 %801
  %803 = vrot.lane.b32.xlu0 %v409, 48
  %v804 = vpop.permute.xlu0 %803
  %805 = vrot.lane.b32.xlu0 %v410, 48
  %v806 = vpop.permute.xlu0 %805
  %807 = vrot.lane.b32.xlu0 %v411, 48
  %v808 = vpop.permute.xlu0 %807
  %809 = vrot.lane.b32.xlu0 %v412, 48
  %v810 = vpop.permute.xlu0 %809
  %811 = vrot.lane.b32.xlu0 %v413, 48
  %v812 = vpop.permute.xlu0 %811
  %813 = vrot.lane.b32.xlu0 %v414, 48
  %v814 = vpop.permute.xlu0 %813
  %847 = vrot.lane.b32.xlu0 %v415, 56
  %v848 = vpop.permute.xlu0 %847
  %849 = vrot.lane.b32.xlu0 %v416, 56
  %v850 = vpop.permute.xlu0 %849
  %851 = vrot.lane.b32.xlu0 %v417, 56
  %v852 = vpop.permute.xlu0 %851
  %853 = vrot.lane.b32.xlu0 %v418, 56
  %v854 = vpop.permute.xlu0 %853
  %855 = vrot.lane.b32.xlu0 %v419, 56
  %v856 = vpop.permute.xlu0 %855
  %857 = vrot.lane.b32.xlu0 %v420, 56
  %v858 = vpop.permute.xlu0 %857
  %859 = vrot.lane.b32.xlu0 %v421, 56
  %v860 = vpop.permute.xlu0 %859
  %861 = vrot.lane.b32.xlu0 %v422, 56
  %v862 = vpop.permute.xlu0 %861
  %863 = vrot.lane.b32.xlu0 %v423, 56
  %v864 = vpop.permute.xlu0 %863
  %865 = vrot.lane.b32.xlu0 %v424, 56
  %v866 = vpop.permute.xlu0 %865
  %867 = vrot.lane.b32.xlu0 %v425, 56
  %v868 = vpop.permute.xlu0 %867
  %869 = vrot.lane.b32.xlu0 %v426, 56
  %v870 = vpop.permute.xlu0 %869
  %871 = vrot.lane.b32.xlu0 %v427, 56
  %v872 = vpop.permute.xlu0 %871
  %873 = vrot.lane.b32.xlu0 %v428, 56
  %v874 = vpop.permute.xlu0 %873
  %875 = vrot.lane.b32.xlu0 %v429, 56
  %v876 = vpop.permute.xlu0 %875
  %877 = vrot.lane.b32.xlu0 %v430, 56
  %v878 = vpop.permute.xlu0 %877
  %911 = vrot.lane.b32.xlu0 %v431, 64
  %v912 = vpop.permute.xlu0 %911
  %913 = vrot.lane.b32.xlu0 %v432, 64
  %v914 = vpop.permute.xlu0 %913
  %915 = vrot.lane.b32.xlu0 %v433, 64
  %v916 = vpop.permute.xlu0 %915
  %917 = vrot.lane.b32.xlu0 %v434, 64
  %v918 = vpop.permute.xlu0 %917
  %919 = vrot.lane.b32.xlu0 %v435, 64
  %v920 = vpop.permute.xlu0 %919
  %921 = vrot.lane.b32.xlu0 %v436, 64
  %v922 = vpop.permute.xlu0 %921
  %923 = vrot.lane.b32.xlu0 %v437, 64
  %v924 = vpop.permute.xlu0 %923
  %925 = vrot.lane.b32.xlu0 %v438, 64
  %v926 = vpop.permute.xlu0 %925
  %927 = vrot.lane.b32.xlu0 %v439, 64
  %v928 = vpop.permute.xlu0 %927
  %929 = vrot.lane.b32.xlu0 %v440, 64
  %v930 = vpop.permute.xlu0 %929
  %931 = vrot.lane.b32.xlu0 %v441, 64
  %v932 = vpop.permute.xlu0 %931
  %933 = vrot.lane.b32.xlu0 %v442, 64
  %v934 = vpop.permute.xlu0 %933
  %935 = vrot.lane.b32.xlu0 %v443, 64
  %v936 = vpop.permute.xlu0 %935
  %937 = vrot.lane.b32.xlu0 %v444, 64
  %v938 = vpop.permute.xlu0 %937
  %939 = vrot.lane.b32.xlu0 %v445, 64
  %v940 = vpop.permute.xlu0 %939
  %941 = vrot.lane.b32.xlu0 %v446, 64
  %v942 = vpop.permute.xlu0 %941
  %v959 = vsel %vm47, %v302, %v464
  %v960 = vsel %vm47, %v303, %v466
  %v961 = vsel %vm47, %v304, %v468
  %v962 = vsel %vm47, %v305, %v470
  %v963 = vsel %vm47, %v306, %v472
  %v964 = vsel %vm47, %v307, %v474
  %v965 = vsel %vm47, %v308, %v476
  %v966 = vsel %vm47, %v309, %v478
  %v967 = vsel %vm47, %v310, %v480
  %v968 = vsel %vm47, %v311, %v482
  %v969 = vsel %vm47, %v312, %v484
  %v970 = vsel %vm47, %v313, %v486
  %v971 = vsel %vm47, %v314, %v488
  %v972 = vsel %vm47, %v315, %v490
  %v973 = vsel %vm47, %v316, %v492
  %v974 = vsel %vm47, %v317, %v494
  %vm975 = vcmask 130048
  %v976 = vsel %vm975, %v959, %v528
  %v977 = vsel %vm975, %v960, %v530
  %v978 = vsel %vm975, %v961, %v532
  %v979 = vsel %vm975, %v962, %v534
  %v980 = vsel %vm975, %v963, %v536
  %v981 = vsel %vm975, %v964, %v538
  %v982 = vsel %vm975, %v965, %v540
  %v983 = vsel %vm975, %v966, %v542
  %v984 = vsel %vm975, %v967, %v544
  %v985 = vsel %vm975, %v968, %v546
  %v986 = vsel %vm975, %v969, %v548
  %v987 = vsel %vm975, %v970, %v550
  %v988 = vsel %vm975, %v971, %v552
  %v989 = vsel %vm975, %v972, %v554
  %v990 = vsel %vm975, %v973, %v556
  %v991 = vsel %vm975, %v974, %v558
  %vm992 = vcmask 195584
  %v993 = vsel %vm992, %v976, %v592
  %v994 = vsel %vm992, %v977, %v594
  %v995 = vsel %vm992, %v978, %v596
  %v996 = vsel %vm992, %v979, %v598
  %v997 = vsel %vm992, %v980, %v600
  %v998 = vsel %vm992, %v981, %v602
  %v999 = vsel %vm992, %v982, %v604
  %v1000 = vsel %vm992, %v983, %v606
  %v1001 = vsel %vm992, %v984, %v608
  %v1002 = vsel %vm992, %v985, %v610
  %v1003 = vsel %vm992, %v986, %v612
  %v1004 = vsel %vm992, %v987, %v614
  %v1005 = vsel %vm992, %v988, %v616
  %v1006 = vsel %vm992, %v989, %v618
  %v1007 = vsel %vm992, %v990, %v620
  %v1008 = vsel %vm992, %v991, %v622
  %vm1009 = vcmask 261120
  %v1010 = vsel %vm1009, %v993, %v656
  %v1011 = vsel %vm1009, %v994, %v658
  %v1012 = vsel %vm1009, %v995, %v660
  %v1013 = vsel %vm1009, %v996, %v662
  %v1014 = vsel %vm1009, %v997, %v664
  %v1015 = vsel %vm1009, %v998, %v666
  %v1016 = vsel %vm1009, %v999, %v668
  %v1017 = vsel %vm1009, %v1000, %v670
  %v1018 = vsel %vm1009, %v1001, %v672
  %v1019 = vsel %vm1009, %v1002, %v674
  %v1020 = vsel %vm1009, %v1003, %v676
  %v1021 = vsel %vm1009, %v1004, %v678
  %v1022 = vsel %vm1009, %v1005, %v680
  %v1023 = vsel %vm1009, %v1006, %v682
  %v1024 = vsel %vm1009, %v1007, %v684
  %v1025 = vsel %vm1009, %v1008, %v686
  %vm1026 = vcmask 326656
  %v1027 = vsel %vm1026, %v1010, %v720
  %v1028 = vsel %vm1026, %v1011, %v722
  %v1029 = vsel %vm1026, %v1012, %v724
  %v1030 = vsel %vm1026, %v1013, %v726
  %v1031 = vsel %vm1026, %v1014, %v728
  %v1032 = vsel %vm1026, %v1015, %v730
  %v1033 = vsel %vm1026, %v1016, %v732
  %v1034 = vsel %vm1026, %v1017, %v734
  %v1035 = vsel %vm1026, %v1018, %v736
  %v1036 = vsel %vm1026, %v1019, %v738
  %v1037 = vsel %vm1026, %v1020, %v740
  %v1038 = vsel %vm1026, %v1021, %v742
  %v1039 = vsel %vm1026, %v1022, %v744
  %v1040 = vsel %vm1026, %v1023, %v746
  %v1041 = vsel %vm1026, %v1024, %v748
  %v1042 = vsel %vm1026, %v1025, %v750
  %vm1043 = vcmask 392192
  %v1044 = vsel %vm1043, %v1027, %v784
  %v1045 = vsel %vm1043, %v1028, %v786
  %v1046 = vsel %vm1043, %v1029, %v788
  %v1047 = vsel %vm1043, %v1030, %v790
  %v1048 = vsel %vm1043, %v1031, %v792
  %v1049 = vsel %vm1043, %v1032, %v794
  %v1050 = vsel %vm1043, %v1033, %v796
  %v1051 = vsel %vm1043, %v1034, %v798
  %v1052 = vsel %vm1043, %v1035, %v800
  %v1053 = vsel %vm1043, %v1036, %v802
  %v1054 = vsel %vm1043, %v1037, %v804
  %v1055 = vsel %vm1043, %v1038, %v806
  %v1056 = vsel %vm1043, %v1039, %v808
  %v1057 = vsel %vm1043, %v1040, %v810
  %v1058 = vsel %vm1043, %v1041, %v812
  %v1059 = vsel %vm1043, %v1042, %v814
  %vm1060 = vcmask 457728
  %v1061 = vsel %vm1060, %v1044, %v848
  %v1062 = vsel %vm1060, %v1045, %v850
  %v1063 = vsel %vm1060, %v1046, %v852
  %v1064 = vsel %vm1060, %v1047, %v854
  %v1065 = vsel %vm1060, %v1048, %v856
  %v1066 = vsel %vm1060, %v1049, %v858
  %v1067 = vsel %vm1060, %v1050, %v860
  %v1068 = vsel %vm1060, %v1051, %v862
  %v1069 = vsel %vm1060, %v1052, %v864
  %v1070 = vsel %vm1060, %v1053, %v866
  %v1071 = vsel %vm1060, %v1054, %v868
  %v1072 = vsel %vm1060, %v1055, %v870
  %v1073 = vsel %vm1060, %v1056, %v872
  %v1074 = vsel %vm1060, %v1057, %v874
  %v1075 = vsel %vm1060, %v1058, %v876
  %v1076 = vsel %vm1060, %v1059, %v878
  %vm1077 = vcmask 523264
  %v1078 = vsel %vm1077, %v1061, %v912
  %v1079 = vsel %vm1077, %v1062, %v914
  %v1080 = vsel %vm1077, %v1063, %v916
  %v1081 = vsel %vm1077, %v1064, %v918
  %v1082 = vsel %vm1077, %v1065, %v920
  %v1083 = vsel %vm1077, %v1066, %v922
  %v1084 = vsel %vm1077, %v1067, %v924
  %v1085 = vsel %vm1077, %v1068, %v926
  %v1086 = vsel %vm1077, %v1069, %v928
  %v1087 = vsel %vm1077, %v1070, %v930
  %v1088 = vsel %vm1077, %v1071, %v932
  %v1089 = vsel %vm1077, %v1072, %v934
  %v1090 = vsel %vm1077, %v1073, %v936
  %v1091 = vsel %vm1077, %v1074, %v938
  %v1092 = vsel %vm1077, %v1075, %v940
  %v1093 = vsel %vm1077, %v1076, %v942
  %v1094 = vld [vmem:[%s1] sm:$0xff]
  %v1095 = vld [vmem:[%s1 + $0x8] sm:$0xff]
  %v1096 = vld [vmem:[%s1 + $0x10] sm:$0xff]
  %v1097 = vld [vmem:[%s1 + $0x18] sm:$0xff]
  %v1098 = vld [vmem:[%s1 + $0x20] sm:$0xff]
  %v1099 = vld [vmem:[%s1 + $0x28] sm:$0xff]
  %v1100 = vld [vmem:[%s1 + $0x30] sm:$0xff]
  %v1101 = vld [vmem:[%s1 + $0x38] sm:$0xff]
  %v1102 = vld [vmem:[%s1 + $0x40] sm:$0xff]
  %vm1103 = vcmask 588800
  %v1105 = vsel %vm1103, %v1078, 0
  %v1108 = vsel %vm1103, %v1079, 0
  %v1111 = vsel %vm1103, %v1080, 0
  %v1114 = vsel %vm1103, %v1081, 0
  %v1117 = vsel %vm1103, %v1082, 0
  %v1120 = vsel %vm1103, %v1083, 0
  %v1123 = vsel %vm1103, %v1084, 0
  %v1126 = vsel %vm1103, %v1085, 0
  %v1129 = vsel %vm1103, %v1086, 0
  %v1132 = vsel %vm1103, %v1087, 0
  %v1135 = vsel %vm1103, %v1088, 0
  %v1138 = vsel %vm1103, %v1089, 0
  %v1141 = vsel %vm1103, %v1090, 0
  %v1144 = vsel %vm1103, %v1091, 0
  %v1147 = vsel %vm1103, %v1092, 0
  %v1150 = vsel %vm1103, %v1093, 0
  %1152 = vmatpush.msra.mxu0 0.0
  %1153 = vmatpush.msra.mxu0 0.0
  %1154 = vmatpush.msra.mxu0 0.0
  %1155 = vmatpush.msra.mxu0 0.0
  %1156 = vmatpush.msra.mxu0 0.0
  %1157 = vmatpush.msra.mxu0 0.0
  %1158 = vmatpush.msra.mxu0 0.0
  %1159 = vmatpush.msra.mxu0 %v1102
  %1160 = vmatpush.msra.mxu0 %v1101
  %1161 = vmatpush.msra.mxu0 %v1100
  %1162 = vmatpush.msra.mxu0 %v1099
  %1163 = vmatpush.msra.mxu0 %v1098
  %1164 = vmatpush.msra.mxu0 %v1097
  %1165 = vmatpush.msra.mxu0 %v1096
  %1166 = vmatpush.msra.mxu0 %v1095
  %1167 = vmatpush.msra.mxu0 %v1094
  %1168 = vmatmul.f32.gmra.mxu0 %v1105
  %v1169 = vpop.f32.mrf.mxu0
  %v1170 = vadd.f32 0.0, %v1169
  %1171 = vmatmul.f32.gmra.mxu0 %v1108
  %v1172 = vpop.f32.mrf.mxu0
  %v1173 = vadd.f32 0.0, %v1172
  %1174 = vmatmul.f32.gmra.mxu0 %v1111
  %v1175 = vpop.f32.mrf.mxu0
  %v1176 = vadd.f32 0.0, %v1175
  %1177 = vmatmul.f32.gmra.mxu0 %v1114
  %v1178 = vpop.f32.mrf.mxu0
  %v1179 = vadd.f32 0.0, %v1178
  %1180 = vmatmul.f32.gmra.mxu0 %v1117
  %v1181 = vpop.f32.mrf.mxu0
  %v1182 = vadd.f32 0.0, %v1181
  %1183 = vmatmul.f32.gmra.mxu0 %v1120
  %v1184 = vpop.f32.mrf.mxu0
  %v1185 = vadd.f32 0.0, %v1184
  %1186 = vmatmul.f32.gmra.mxu0 %v1123
  %v1187 = vpop.f32.mrf.mxu0
  %v1188 = vadd.f32 0.0, %v1187
  %1189 = vmatmul.f32.gmra.mxu0 %v1126
  %v1190 = vpop.f32.mrf.mxu0
  %v1191 = vadd.f32 0.0, %v1190
  %1192 = vmatmul.f32.gmra.mxu0 %v1129
  %v1193 = vpop.f32.mrf.mxu0
  %v1194 = vadd.f32 0.0, %v1193
  %1195 = vmatmul.f32.gmra.mxu0 %v1132
  %v1196 = vpop.f32.mrf.mxu0
  %v1197 = vadd.f32 0.0, %v1196
  %1198 = vmatmul.f32.gmra.mxu0 %v1135
  %v1199 = vpop.f32.mrf.mxu0
  %v1200 = vadd.f32 0.0, %v1199
  %1201 = vmatmul.f32.gmra.mxu0 %v1138
  %v1202 = vpop.f32.mrf.mxu0
  %v1203 = vadd.f32 0.0, %v1202
  %1204 = vmatmul.f32.gmra.mxu0 %v1141
  %v1205 = vpop.f32.mrf.mxu0
  %v1206 = vadd.f32 0.0, %v1205
  %1207 = vmatmul.f32.gmra.mxu0 %v1144
  %v1208 = vpop.f32.mrf.mxu0
  %v1209 = vadd.f32 0.0, %v1208
  %1210 = vmatmul.f32.gmra.mxu0 %v1147
  %v1211 = vpop.f32.mrf.mxu0
  %v1212 = vadd.f32 0.0, %v1211
  %1213 = vmatmul.f32.gmra.mxu0 %v1150
  %v1214 = vpop.f32.mrf.mxu0
  %v1215 = vadd.f32 0.0, %v1214
  %1216 = vdwg.mxu0
  %v1217 = vld [vmem:[%s4] sm:$0x1]
  %v1218 = vld [vmem:[%s5] sm:$0x1]
  %v1219 = vsel %vm47, %v1170, 0.0
  %v1220 = vsel %vm47, %v1173, 0.0
  %v1221 = vadd.f32 %v1219, %v1220
  %v1222 = vsel %vm47, %v1176, 0.0
  %v1223 = vadd.f32 %v1221, %v1222
  %v1224 = vsel %vm47, %v1179, 0.0
  %v1225 = vadd.f32 %v1223, %v1224
  %v1226 = vsel %vm47, %v1182, 0.0
  %v1227 = vadd.f32 %v1225, %v1226
  %v1228 = vsel %vm47, %v1185, 0.0
  %v1229 = vadd.f32 %v1227, %v1228
  %v1230 = vsel %vm47, %v1188, 0.0
  %v1231 = vadd.f32 %v1229, %v1230
  %v1232 = vsel %vm47, %v1191, 0.0
  %v1233 = vadd.f32 %v1231, %v1232
  %v1234 = vsel %vm47, %v1194, 0.0
  %v1235 = vadd.f32 %v1233, %v1234
  %v1236 = vsel %vm47, %v1197, 0.0
  %v1237 = vadd.f32 %v1235, %v1236
  %v1238 = vsel %vm47, %v1200, 0.0
  %v1239 = vadd.f32 %v1237, %v1238
  %v1240 = vsel %vm47, %v1203, 0.0
  %v1241 = vadd.f32 %v1239, %v1240
  %v1242 = vsel %vm47, %v1206, 0.0
  %v1243 = vadd.f32 %v1241, %v1242
  %v1244 = vsel %vm47, %v1209, 0.0
  %v1245 = vadd.f32 %v1243, %v1244
  %v1246 = vsel %vm47, %v1212, 0.0
  %v1247 = vadd.f32 %v1245, %v1246
  %v1248 = vsel %vm47, %v1215, 0.0
  %v1249 = vadd.f32 %v1247, %v1248
  %v1250 = vrot.slane %v1249, 4
  %v1251 = vadd.f32 %v1249, %v1250
  %v1252 = vrot.slane %v1251, 2
  %v1253 = vadd.f32 %v1251, %v1252
  %v1254 = vrot.slane %v1253, 1
  %v1255 = vadd.f32 %v1253, %v1254
  %v1256 = vmul.f32 %v1255, %v91
  %v1257 = vsub.f32 %v1170, %v1256
  %v1258 = vsub.f32 %v1173, %v1256
  %v1259 = vsub.f32 %v1176, %v1256
  %v1260 = vsub.f32 %v1179, %v1256
  %v1261 = vsub.f32 %v1182, %v1256
  %v1262 = vsub.f32 %v1185, %v1256
  %v1263 = vsub.f32 %v1188, %v1256
  %v1264 = vsub.f32 %v1191, %v1256
  %v1265 = vsub.f32 %v1194, %v1256
  %v1266 = vsub.f32 %v1197, %v1256
  %v1267 = vsub.f32 %v1200, %v1256
  %v1268 = vsub.f32 %v1203, %v1256
  %v1269 = vsub.f32 %v1206, %v1256
  %v1270 = vsub.f32 %v1209, %v1256
  %v1271 = vsub.f32 %v1212, %v1256
  %v1272 = vsub.f32 %v1215, %v1256
  %v1273 = vmul.f32 %v1257, %v1257
  %v1274 = vmul.f32 %v1258, %v1258
  %v1275 = vmul.f32 %v1259, %v1259
  %v1276 = vmul.f32 %v1260, %v1260
  %v1277 = vmul.f32 %v1261, %v1261
  %v1278 = vmul.f32 %v1262, %v1262
  %v1279 = vmul.f32 %v1263, %v1263
  %v1280 = vmul.f32 %v1264, %v1264
  %v1281 = vmul.f32 %v1265, %v1265
  %v1282 = vmul.f32 %v1266, %v1266
  %v1283 = vmul.f32 %v1267, %v1267
  %v1284 = vmul.f32 %v1268, %v1268
  %v1285 = vmul.f32 %v1269, %v1269
  %v1286 = vmul.f32 %v1270, %v1270
  %v1287 = vmul.f32 %v1271, %v1271
  %v1288 = vmul.f32 %v1272, %v1272
  %v1289 = vsel %vm47, %v1273, 0.0
  %v1290 = vsel %vm47, %v1274, 0.0
  %v1291 = vadd.f32 %v1289, %v1290
  %v1292 = vsel %vm47, %v1275, 0.0
  %v1293 = vadd.f32 %v1291, %v1292
  %v1294 = vsel %vm47, %v1276, 0.0
  %v1295 = vadd.f32 %v1293, %v1294
  %v1296 = vsel %vm47, %v1277, 0.0
  %v1297 = vadd.f32 %v1295, %v1296
  %v1298 = vsel %vm47, %v1278, 0.0
  %v1299 = vadd.f32 %v1297, %v1298
  %v1300 = vsel %vm47, %v1279, 0.0
  %v1301 = vadd.f32 %v1299, %v1300
  %v1302 = vsel %vm47, %v1280, 0.0
  %v1303 = vadd.f32 %v1301, %v1302
  %v1304 = vsel %vm47, %v1281, 0.0
  %v1305 = vadd.f32 %v1303, %v1304
  %v1306 = vsel %vm47, %v1282, 0.0
  %v1307 = vadd.f32 %v1305, %v1306
  %v1308 = vsel %vm47, %v1283, 0.0
  %v1309 = vadd.f32 %v1307, %v1308
  %v1310 = vsel %vm47, %v1284, 0.0
  %v1311 = vadd.f32 %v1309, %v1310
  %v1312 = vsel %vm47, %v1285, 0.0
  %v1313 = vadd.f32 %v1311, %v1312
  %v1314 = vsel %vm47, %v1286, 0.0
  %v1315 = vadd.f32 %v1313, %v1314
  %v1316 = vsel %vm47, %v1287, 0.0
  %v1317 = vadd.f32 %v1315, %v1316
  %v1318 = vsel %vm47, %v1288, 0.0
  %v1319 = vadd.f32 %v1317, %v1318
  %v1320 = vrot.slane %v1319, 4
  %v1321 = vadd.f32 %v1319, %v1320
  %v1322 = vrot.slane %v1321, 2
  %v1323 = vadd.f32 %v1321, %v1322
  %v1324 = vrot.slane %v1323, 1
  %v1325 = vadd.f32 %v1323, %v1324
  %v1326 = vmul.f32 %v1325, %v91
  %v1327 = vadd.f32 %v1326, 1e-05
  %v1328 = vrsqrt.pop %v1327
  %v1329 = vmul.f32 %v1328, %v1327
  %v1330 = vmul.f32 %v1329, %v1328
  %v1331 = vmul.f32 0.5, %v1330
  %v1332 = vsub.f32 1.5, %v1331
  %v1333 = vmul.f32 %v1328, %v1332
  %vm1334 = vweird.f32 %v1327
  %vm1335 = vweird.f32 %v1328
  %vm1336 = vmor %vm1334, %vm1335
  %v1337 = vsel %vm1336, %v1328, %v1333
  %v1338 = vmul.f32 %v1257, %v1337
  %v1339 = vmul.f32 %v1258, %v1337
  %v1340 = vmul.f32 %v1259, %v1337
  %v1341 = vmul.f32 %v1260, %v1337
  %v1342 = vmul.f32 %v1261, %v1337
  %v1343 = vmul.f32 %v1262, %v1337
  %v1344 = vmul.f32 %v1263, %v1337
  %v1345 = vmul.f32 %v1264, %v1337
  %v1346 = vmul.f32 %v1265, %v1337
  %v1347 = vmul.f32 %v1266, %v1337
  %v1348 = vmul.f32 %v1267, %v1337
  %v1349 = vmul.f32 %v1268, %v1337
  %v1350 = vmul.f32 %v1269, %v1337
  %v1351 = vmul.f32 %v1270, %v1337
  %v1352 = vmul.f32 %v1271, %v1337
  %v1353 = vmul.f32 %v1272, %v1337
  %v1355 = vperm.slane %v1217, 0
  %v1357 = vmul.f32 %v1338, %v1355
  %v1358 = vmul.f32 %v1339, %v1355
  %v1359 = vmul.f32 %v1340, %v1355
  %v1360 = vmul.f32 %v1341, %v1355
  %v1361 = vmul.f32 %v1342, %v1355
  %v1362 = vmul.f32 %v1343, %v1355
  %v1363 = vmul.f32 %v1344, %v1355
  %v1364 = vmul.f32 %v1345, %v1355
  %v1365 = vmul.f32 %v1346, %v1355
  %v1366 = vmul.f32 %v1347, %v1355
  %v1367 = vmul.f32 %v1348, %v1355
  %v1368 = vmul.f32 %v1349, %v1355
  %v1369 = vmul.f32 %v1350, %v1355
  %v1370 = vmul.f32 %v1351, %v1355
  %v1371 = vmul.f32 %v1352, %v1355
  %v1372 = vmul.f32 %v1353, %v1355
  %v1374 = vperm.slane %v1218, 0
  %v1376 = vadd.f32 %v1357, %v1374
  %v1377 = vadd.f32 %v1358, %v1374
  %v1378 = vadd.f32 %v1359, %v1374
  %v1379 = vadd.f32 %v1360, %v1374
  %v1380 = vadd.f32 %v1361, %v1374
  %v1381 = vadd.f32 %v1362, %v1374
  %v1382 = vadd.f32 %v1363, %v1374
  %v1383 = vadd.f32 %v1364, %v1374
  %v1384 = vadd.f32 %v1365, %v1374
  %v1385 = vadd.f32 %v1366, %v1374
  %v1386 = vadd.f32 %v1367, %v1374
  %v1387 = vadd.f32 %v1368, %v1374
  %v1388 = vadd.f32 %v1369, %v1374
  %v1389 = vadd.f32 %v1370, %v1374
  %v1390 = vadd.f32 %v1371, %v1374
  %v1391 = vadd.f32 %v1372, %v1374
  %v1392 = vld [vmem:[%s6] sm:$0x1]
  %v1393 = vld [vmem:[%s7] sm:$0x1]
  %vm1394 = vcmask 130112
  %v1395 = vsel %vm1394, %v29, 0.0
  %v1396 = vsel %vm1394, %v30, 0.0
  %v1397 = vadd.f32 %v1395, %v1396
  %v1398 = vsel %vm1394, %v31, 0.0
  %v1399 = vadd.f32 %v1397, %v1398
  %v1400 = vsel %vm1394, %v32, 0.0
  %v1401 = vadd.f32 %v1399, %v1400
  %v1402 = vsel %vm1394, %v33, 0.0
  %v1403 = vadd.f32 %v1401, %v1402
  %v1404 = vsel %vm1394, %v34, 0.0
  %v1405 = vadd.f32 %v1403, %v1404
  %v1406 = vsel %vm1394, %v35, 0.0
  %v1407 = vadd.f32 %v1405, %v1406
  %v1408 = vsel %vm1394, %v36, 0.0
  %v1409 = vadd.f32 %v1407, %v1408
  %v1410 = vsel %vm1394, %v37, 0.0
  %v1411 = vadd.f32 %v1409, %v1410
  %v1412 = vsel %vm1394, %v38, 0.0
  %v1413 = vadd.f32 %v1411, %v1412
  %v1414 = vsel %vm1394, %v39, 0.0
  %v1415 = vadd.f32 %v1413, %v1414
  %v1416 = vsel %vm1394, %v40, 0.0
  %v1417 = vadd.f32 %v1415, %v1416
  %v1418 = vsel %vm1394, %v41, 0.0
  %v1419 = vadd.f32 %v1417, %v1418
  %v1420 = vsel %vm1394, %v42, 0.0
  %v1421 = vadd.f32 %v1419, %v1420
  %v1422 = vsel %vm1394, %v43, 0.0
  %v1423 = vadd.f32 %v1421, %v1422
  %v1424 = vsel %vm1394, %v44, 0.0
  %v1425 = vadd.f32 %v1423, %v1424
  %v1426 = vrot.slane %v1425, 4
  %v1427 = vadd.f32 %v1425, %v1426
  %v1428 = vrot.slane %v1427, 2
  %v1429 = vadd.f32 %v1427, %v1428
  %v1430 = vrot.slane %v1429, 1
  %v1431 = vadd.f32 %v1429, %v1430
  %v1432 = vmul.f32 %v1431, %v91
  %v1433 = vsub.f32 %v29, %v1432
  %v1434 = vsub.f32 %v30, %v1432
  %v1435 = vsub.f32 %v31, %v1432
  %v1436 = vsub.f32 %v32, %v1432
  %v1437 = vsub.f32 %v33, %v1432
  %v1438 = vsub.f32 %v34, %v1432
  %v1439 = vsub.f32 %v35, %v1432
  %v1440 = vsub.f32 %v36, %v1432
  %v1441 = vsub.f32 %v37, %v1432
  %v1442 = vsub.f32 %v38, %v1432
  %v1443 = vsub.f32 %v39, %v1432
  %v1444 = vsub.f32 %v40, %v1432
  %v1445 = vsub.f32 %v41, %v1432
  %v1446 = vsub.f32 %v42, %v1432
  %v1447 = vsub.f32 %v43, %v1432
  %v1448 = vsub.f32 %v44, %v1432
  %v1449 = vmul.f32 %v1433, %v1433
  %v1450 = vmul.f32 %v1434, %v1434
  %v1451 = vmul.f32 %v1435, %v1435
  %v1452 = vmul.f32 %v1436, %v1436
  %v1453 = vmul.f32 %v1437, %v1437
  %v1454 = vmul.f32 %v1438, %v1438
  %v1455 = vmul.f32 %v1439, %v1439
  %v1456 = vmul.f32 %v1440, %v1440
  %v1457 = vmul.f32 %v1441, %v1441
  %v1458 = vmul.f32 %v1442, %v1442
  %v1459 = vmul.f32 %v1443, %v1443
  %v1460 = vmul.f32 %v1444, %v1444
  %v1461 = vmul.f32 %v1445, %v1445
  %v1462 = vmul.f32 %v1446, %v1446
  %v1463 = vmul.f32 %v1447, %v1447
  %v1464 = vmul.f32 %v1448, %v1448
  %v1465 = vsel %vm1394, %v1449, 0.0
  %v1466 = vsel %vm1394, %v1450, 0.0
  %v1467 = vadd.f32 %v1465, %v1466
  %v1468 = vsel %vm1394, %v1451, 0.0
  %v1469 = vadd.f32 %v1467, %v1468
  %v1470 = vsel %vm1394, %v1452, 0.0
  %v1471 = vadd.f32 %v1469, %v1470
  %v1472 = vsel %vm1394, %v1453, 0.0
  %v1473 = vadd.f32 %v1471, %v1472
  %v1474 = vsel %vm1394, %v1454, 0.0
  %v1475 = vadd.f32 %v1473, %v1474
  %v1476 = vsel %vm1394, %v1455, 0.0
  %v1477 = vadd.f32 %v1475, %v1476
  %v1478 = vsel %vm1394, %v1456, 0.0
  %v1479 = vadd.f32 %v1477, %v1478
  %v1480 = vsel %vm1394, %v1457, 0.0
  %v1481 = vadd.f32 %v1479, %v1480
  %v1482 = vsel %vm1394, %v1458, 0.0
  %v1483 = vadd.f32 %v1481, %v1482
  %v1484 = vsel %vm1394, %v1459, 0.0
  %v1485 = vadd.f32 %v1483, %v1484
  %v1486 = vsel %vm1394, %v1460, 0.0
  %v1487 = vadd.f32 %v1485, %v1486
  %v1488 = vsel %vm1394, %v1461, 0.0
  %v1489 = vadd.f32 %v1487, %v1488
  %v1490 = vsel %vm1394, %v1462, 0.0
  %v1491 = vadd.f32 %v1489, %v1490
  %v1492 = vsel %vm1394, %v1463, 0.0
  %v1493 = vadd.f32 %v1491, %v1492
  %v1494 = vsel %vm1394, %v1464, 0.0
  %v1495 = vadd.f32 %v1493, %v1494
  %v1496 = vrot.slane %v1495, 4
  %v1497 = vadd.f32 %v1495, %v1496
  %v1498 = vrot.slane %v1497, 2
  %v1499 = vadd.f32 %v1497, %v1498
  %v1500 = vrot.slane %v1499, 1
  %v1501 = vadd.f32 %v1499, %v1500
  %v1502 = vmul.f32 %v1501, %v91
  %v1503 = vadd.f32 %v1502, 1e-05
  %v1504 = vrsqrt.pop %v1503
  %v1505 = vmul.f32 %v1504, %v1503
  %v1506 = vmul.f32 %v1505, %v1504
  %v1507 = vmul.f32 0.5, %v1506
  %v1508 = vsub.f32 1.5, %v1507
  %v1509 = vmul.f32 %v1504, %v1508
  %vm1510 = vweird.f32 %v1503
  %vm1511 = vweird.f32 %v1504
  %vm1512 = vmor %vm1510, %vm1511
  %v1513 = vsel %vm1512, %v1504, %v1509
  %v1514 = vmul.f32 %v1433, %v1513
  %v1515 = vmul.f32 %v1434, %v1513
  %v1516 = vmul.f32 %v1435, %v1513
  %v1517 = vmul.f32 %v1436, %v1513
  %v1518 = vmul.f32 %v1437, %v1513
  %v1519 = vmul.f32 %v1438, %v1513
  %v1520 = vmul.f32 %v1439, %v1513
  %v1521 = vmul.f32 %v1440, %v1513
  %v1522 = vmul.f32 %v1441, %v1513
  %v1523 = vmul.f32 %v1442, %v1513
  %v1524 = vmul.f32 %v1443, %v1513
  %v1525 = vmul.f32 %v1444, %v1513
  %v1526 = vmul.f32 %v1445, %v1513
  %v1527 = vmul.f32 %v1446, %v1513
  %v1528 = vmul.f32 %v1447, %v1513
  %v1529 = vmul.f32 %v1448, %v1513
  %v1531 = vperm.slane %v1392, 0
  %1532 = vrot.lane.b32.xlu0 %v1531, 8
  %v1533 = vpop.permute.xlu0 %1532
  %v1535 = vmul.f32 %v1514, %v1533
  %v1536 = vmul.f32 %v1515, %v1533
  %v1537 = vmul.f32 %v1516, %v1533
  %v1538 = vmul.f32 %v1517, %v1533
  %v1539 = vmul.f32 %v1518, %v1533
  %v1540 = vmul.f32 %v1519, %v1533
  %v1541 = vmul.f32 %v1520, %v1533
  %v1542 = vmul.f32 %v1521, %v1533
  %v1543 = vmul.f32 %v1522, %v1533
  %v1544 = vmul.f32 %v1523, %v1533
  %v1545 = vmul.f32 %v1524, %v1533
  %v1546 = vmul.f32 %v1525, %v1533
  %v1547 = vmul.f32 %v1526, %v1533
  %v1548 = vmul.f32 %v1527, %v1533
  %v1549 = vmul.f32 %v1528, %v1533
  %v1550 = vmul.f32 %v1529, %v1533
  %v1552 = vperm.slane %v1393, 0
  %1553 = vrot.lane.b32.xlu0 %v1552, 8
  %v1554 = vpop.permute.xlu0 %1553
  %v1556 = vadd.f32 %v1535, %v1554
  %v1557 = vadd.f32 %v1536, %v1554
  %v1558 = vadd.f32 %v1537, %v1554
  %v1559 = vadd.f32 %v1538, %v1554
  %v1560 = vadd.f32 %v1539, %v1554
  %v1561 = vadd.f32 %v1540, %v1554
  %v1562 = vadd.f32 %v1541, %v1554
  %v1563 = vadd.f32 %v1542, %v1554
  %v1564 = vadd.f32 %v1543, %v1554
  %v1565 = vadd.f32 %v1544, %v1554
  %v1566 = vadd.f32 %v1545, %v1554
  %v1567 = vadd.f32 %v1546, %v1554
  %v1568 = vadd.f32 %v1547, %v1554
  %v1569 = vadd.f32 %v1548, %v1554
  %v1570 = vadd.f32 %v1549, %v1554
  %v1571 = vadd.f32 %v1550, %v1554
  %1588 = vrot.lane.b32.xlu0 %v1556, 120
  %v1589 = vpop.permute.xlu0 %1588
  %1590 = vrot.lane.b32.xlu0 %v1557, 120
  %v1591 = vpop.permute.xlu0 %1590
  %1592 = vrot.lane.b32.xlu0 %v1558, 120
  %v1593 = vpop.permute.xlu0 %1592
  %1594 = vrot.lane.b32.xlu0 %v1559, 120
  %v1595 = vpop.permute.xlu0 %1594
  %1596 = vrot.lane.b32.xlu0 %v1560, 120
  %v1597 = vpop.permute.xlu0 %1596
  %1598 = vrot.lane.b32.xlu0 %v1561, 120
  %v1599 = vpop.permute.xlu0 %1598
  %1600 = vrot.lane.b32.xlu0 %v1562, 120
  %v1601 = vpop.permute.xlu0 %1600
  %1602 = vrot.lane.b32.xlu0 %v1563, 120
  %v1603 = vpop.permute.xlu0 %1602
  %1604 = vrot.lane.b32.xlu0 %v1564, 120
  %v1605 = vpop.permute.xlu0 %1604
  %1606 = vrot.lane.b32.xlu0 %v1565, 120
  %v1607 = vpop.permute.xlu0 %1606
  %1608 = vrot.lane.b32.xlu0 %v1566, 120
  %v1609 = vpop.permute.xlu0 %1608
  %1610 = vrot.lane.b32.xlu0 %v1567, 120
  %v1611 = vpop.permute.xlu0 %1610
  %1612 = vrot.lane.b32.xlu0 %v1568, 120
  %v1613 = vpop.permute.xlu0 %1612
  %1614 = vrot.lane.b32.xlu0 %v1569, 120
  %v1615 = vpop.permute.xlu0 %1614
  %1616 = vrot.lane.b32.xlu0 %v1570, 120
  %v1617 = vpop.permute.xlu0 %1616
  %1618 = vrot.lane.b32.xlu0 %v1571, 120
  %v1619 = vpop.permute.xlu0 %1618
  %v1636 = vadd.f32 %v1376, %v1589
  %v1637 = vadd.f32 %v1377, %v1591
  %v1638 = vadd.f32 %v1378, %v1593
  %v1639 = vadd.f32 %v1379, %v1595
  %v1640 = vadd.f32 %v1380, %v1597
  %v1641 = vadd.f32 %v1381, %v1599
  %v1642 = vadd.f32 %v1382, %v1601
  %v1643 = vadd.f32 %v1383, %v1603
  %v1644 = vadd.f32 %v1384, %v1605
  %v1645 = vadd.f32 %v1385, %v1607
  %v1646 = vadd.f32 %v1386, %v1609
  %v1647 = vadd.f32 %v1387, %v1611
  %v1648 = vadd.f32 %v1388, %v1613
  %v1649 = vadd.f32 %v1389, %v1615
  %v1650 = vadd.f32 %v1390, %v1617
  %v1651 = vadd.f32 %v1391, %v1619
  %v1652 = vmax.f32 %v1636, 0.0
  %v1653 = vmax.f32 %v1637, 0.0
  %v1654 = vmax.f32 %v1638, 0.0
  %v1655 = vmax.f32 %v1639, 0.0
  %v1656 = vmax.f32 %v1640, 0.0
  %v1657 = vmax.f32 %v1641, 0.0
  %v1658 = vmax.f32 %v1642, 0.0
  %v1659 = vmax.f32 %v1643, 0.0
  %v1660 = vmax.f32 %v1644, 0.0
  %v1661 = vmax.f32 %v1645, 0.0
  %v1662 = vmax.f32 %v1646, 0.0
  %v1663 = vmax.f32 %v1647, 0.0
  %v1664 = vmax.f32 %v1648, 0.0
  %v1665 = vmax.f32 %v1649, 0.0
  %v1666 = vmax.f32 %v1650, 0.0
  %v1667 = vmax.f32 %v1651, 0.0
  %1668 = vst.msk [vmem:[%s8] sm:$0xff] %vm47, %v1652
  %1669 = vst.msk [vmem:[%s8 + $0x8] sm:$0xff] %vm47, %v1653
  %1670 = vst.msk [vmem:[%s8 + $0x10] sm:$0xff] %vm47, %v1654
  %1671 = vst.msk [vmem:[%s8 + $0x18] sm:$0xff] %vm47, %v1655
  %1672 = vst.msk [vmem:[%s8 + $0x20] sm:$0xff] %vm47, %v1656
  %1673 = vst.msk [vmem:[%s8 + $0x28] sm:$0xff] %vm47, %v1657
  %1674 = vst.msk [vmem:[%s8 + $0x30] sm:$0xff] %vm47, %v1658
  %1675 = vst.msk [vmem:[%s8 + $0x38] sm:$0xff] %vm47, %v1659
  %1676 = vst.msk [vmem:[%s8 + $0x40] sm:$0xff] %vm47, %v1660
  %1677 = vst.msk [vmem:[%s8 + $0x48] sm:$0xff] %vm47, %v1661
  %1678 = vst.msk [vmem:[%s8 + $0x50] sm:$0xff] %vm47, %v1662
  %1679 = vst.msk [vmem:[%s8 + $0x58] sm:$0xff] %vm47, %v1663
  %1680 = vst.msk [vmem:[%s8 + $0x60] sm:$0xff] %vm47, %v1664
  %1681 = vst.msk [vmem:[%s8 + $0x68] sm:$0xff] %vm47, %v1665
  %1682 = vst.msk [vmem:[%s8 + $0x70] sm:$0xff] %vm47, %v1666
  %1683 = vst.msk [vmem:[%s8 + $0x78] sm:$0xff] %vm47, %v1667
  // Predicated region
  $region34: #{res_block_forward.3} parent=0 // pred_check
    _
  $region35: #{res_block_forward.3} parent=0 // pred_check_branch
    %1685 = sbr.rel (0) target = $region37
  $region36: #{res_block_forward.3} parent=0 // pred_region
    _
  $region37: #{res_block_forward.3} parent=0 // pred_fallthru
    _
  // Predicated region
  $region38: #{res_block_forward.3} parent=0 // pred_check
    _
  $region39: #{res_block_forward.3} parent=0 // pred_check_branch
    %1687 = sbr.rel (0) target = $region41
  $region40: #{res_block_forward.3} parent=0 // pred_region
    _
  $region41: #{res_block_forward.3} parent=0 // pred_fallthru
    _

</llo_original>
